<compile_context>
chip_gen: v7x
topology: tpu7x:2x2x1
jax: 0.10.0
libtpu: 0.0.40
codegen_flags: <defaults>
</compile_context>

<pallas_src>
import jax
import jax.numpy as jnp
from jax.experimental import pallas as pl
from jax.experimental.pallas import tpu as pltpu

IN_FEATURES = 28 * 28      # 784
K_PAD = 896                # 7 * 128  (lane-aligned contraction dim)
HIDDEN = 512
OUT_FEATURES = 10
OUT_PAD = 128              # lane-dense output slab


def _round_up(x, m):
    return ((x + m - 1) // m) * m


def mlp_kernel(x_ref, w1_ref, b1_ref, w2_ref, b2_ref, o_ref):
    # x_ref : [TB, 896]  bf16     w1_ref: [896, 512] bf16   b1_ref: [1, 512] f32
    # w2_ref: [512, 128] f32      b2_ref: [1, 128]   f32    o_ref : [TB, 128] f32
    h = jnp.dot(x_ref[...], w1_ref[...], preferred_element_type=jnp.float32)
    h = jnp.maximum(h + b1_ref[...], 0.0)                 # bias + ReLU (VPU)
    logits = jnp.dot(h, w2_ref[...], preferred_element_type=jnp.float32)
    o_ref[...] = (logits + b2_ref[...]).astype(o_ref.dtype)


def neural_network_forward(x, w1, b1, w2, b2, *, tb=256):
    """x: [B, 1, 28, 28] float32 (NCHW) -> logits [B, 10] float32.

    w1: [784, 512], b1: [512], w2: [512, 10], b2: [10]  (y = x @ W + b layout,
    numerically identical to PyTorch's x @ W.T + b).
    """
    B = x.shape[0]
    x_flat = x.reshape(B, -1).astype(jnp.float32)          # nn.Flatten -> [B, 784]

    # Batch tile: multiple of 8 sublanes, capped at 256 (matches 2x256 MXU on
    # v6e/v7x; still fine on v5e).  Pad the batch so it divides evenly.
    TB = min(tb, _round_up(B, 8))
    B_pad = _round_up(B, TB)

    # Pad + cast operands once at the wrapper level (cheap XLA ops).
    x_pad = jnp.pad(
        x_flat, ((0, B_pad - B), (0, K_PAD - IN_FEATURES))
    ).astype(jnp.bfloat16)                                  # [B_pad, 896] bf16
    w1_pad = jnp.pad(
        w1, ((0, K_PAD - IN_FEATURES), (0, 0))
    ).astype(jnp.bfloat16)                                  # [896, 512] bf16
    b1_2d = b1.reshape(1, HIDDEN).astype(jnp.float32)       # [1, 512]
    w2_pad = jnp.pad(
        w2, ((0, 0), (0, OUT_PAD - OUT_FEATURES))
    ).astype(jnp.float32)                                   # [512, 128]
    b2_2d = jnp.pad(
        b2.reshape(1, OUT_FEATURES), ((0, 0), (0, OUT_PAD - OUT_FEATURES))
    ).astype(jnp.float32)                                   # [1, 128]

    grid = (pl.cdiv(B_pad, TB),)

    out_padded = pl.pallas_call(
        mlp_kernel,
        out_shape=jax.ShapeDtypeStruct((B_pad, OUT_PAD), jnp.float32),
        grid=grid,
        in_specs=[
            pl.BlockSpec((TB, K_PAD), lambda i: (i, 0)),        # x: tiled over batch
            pl.BlockSpec((K_PAD, HIDDEN), lambda i: (0, 0)),    # W1: VMEM-resident
            pl.BlockSpec((1, HIDDEN), lambda i: (0, 0)),        # b1: VMEM-resident
            pl.BlockSpec((HIDDEN, OUT_PAD), lambda i: (0, 0)),  # W2: VMEM-resident
            pl.BlockSpec((1, OUT_PAD), lambda i: (0, 0)),       # b2: VMEM-resident
        ],
        out_specs=pl.BlockSpec((TB, OUT_PAD), lambda i: (i, 0)),
        compiler_params=pltpu.CompilerParams(
            dimension_semantics=("parallel",)),                 # shard tiles across TCs (v7x)
    )(x_pad, w1_pad, b1_2d, w2_pad, b2_2d)

    # Drop batch padding and the lane padding of the logits.
    return out_padded[:B, :OUT_FEATURES]


def init_params(key):
    """Deterministic init mimicking nn.Linear's uniform(-1/sqrt(fan_in), +)."""
    k1, k2, k3, k4 = jax.random.split(key, 4)
    bound1 = 1.0 / jnp.sqrt(IN_FEATURES)
    bound2 = 1.0 / jnp.sqrt(HIDDEN)
    w1 = jax.random.uniform(k1, (IN_FEATURES, HIDDEN), jnp.float32,
                            -bound1, bound1)
    b1 = jax.random.uniform(k2, (HIDDEN,), jnp.float32, -bound1, bound1)
    w2 = jax.random.uniform(k3, (HIDDEN, OUT_FEATURES), jnp.float32,
                            -bound2, bound2)
    b2 = jax.random.uniform(k4, (OUT_FEATURES,), jnp.float32, -bound2, bound2)
    return w1, b1, w2, b2


if __name__ == "__main__":
    key = jax.random.PRNGKey(0)
    k_x, k_p = jax.random.split(key)

    B = 2
    x = jax.random.normal(k_x, (B, 1, 28, 28), jnp.float32)  # NCHW like MNIST
    w1, b1, w2, b2 = init_params(k_p)

    logits = neural_network_forward(x, w1, b1, w2, b2)
    jax.block_until_ready(logits)

    # Pure-JAX f32 reference of the module's forward pass.
    x_flat = x.reshape(B, -1)
    ref_f32 = jnp.maximum(x_flat @ w1 + b1, 0.0) @ w2 + b2
    # bf16-matched reference (same dtype path as the kernel's first matmul).
    ref_bf16 = (
        jnp.maximum(
            jnp.dot(x_flat.astype(jnp.bfloat16), w1.astype(jnp.bfloat16),
                    preferred_element_type=jnp.float32) + b1, 0.0)
        @ w2 + b2
    )

    assert logits.shape == (B, OUT_FEATURES)
    assert jnp.allclose(logits, ref_bf16, atol=1e-3, rtol=1e-3), \
        "kernel does not match bf16-matched reference"
    assert jnp.allclose(logits, ref_f32, atol=5e-2, rtol=5e-2), \
        "kernel drifted too far from f32 reference"

    print("KERNEL_OK")
</pallas_src>

<mosaic_0001>
module attributes {stable_mosaic.version = 11 : i64} {
  func.func @mlp_kernel(%arg0: i32, %arg1: memref<8x896xbf16, #tpu.memory_space<vmem>>, %arg2: memref<896x512xbf16, #tpu.memory_space<vmem>>, %arg3: memref<1x512xf32, #tpu.memory_space<vmem>>, %arg4: memref<512x128xf32, #tpu.memory_space<vmem>>, %arg5: memref<1x128xf32, #tpu.memory_space<vmem>>, %arg6: memref<8x128xf32, #tpu.memory_space<vmem>>) attributes {dimension_semantics = [#tpu.dimension_semantics<parallel>], iteration_bounds = array<i64: 1>, scalar_prefetch = 0 : i64, scratch_operands = 0 : i64, tpu.core_type = #tpu.core_type<tc>, window_params = [{transform_indices = @transform_0, window_bounds = array<i64: 8, 896>}, {pipeline_mode = #tpu.pipeline_mode<synchronous>, transform_indices = @transform_1, window_bounds = array<i64: 896, 512>}, {pipeline_mode = #tpu.pipeline_mode<synchronous>, transform_indices = @transform_2, window_bounds = array<i64: 1, 512>}, {pipeline_mode = #tpu.pipeline_mode<synchronous>, transform_indices = @transform_3, window_bounds = array<i64: 512, 128>}, {pipeline_mode = #tpu.pipeline_mode<synchronous>, transform_indices = @transform_4, window_bounds = array<i64: 1, 128>}, {transform_indices = @transform_5, window_bounds = array<i64: 8, 128>}]} {
    %c0 = arith.constant 0 : index
    %c0_0 = arith.constant 0 : index
    %0 = vector.load %arg1[%c0, %c0_0] : memref<8x896xbf16, #tpu.memory_space<vmem>>, vector<8x896xbf16>
    %c0_1 = arith.constant 0 : index
    %c0_2 = arith.constant 0 : index
    %1 = vector.load %arg2[%c0_1, %c0_2] : memref<896x512xbf16, #tpu.memory_space<vmem>>, vector<896x512xbf16>
    %cst = arith.constant dense<0.000000e+00> : vector<8x512xf32>
    %2 = tpu.matmul %0, %1, %cst {dimension_numbers = #tpu.dot_dimension_numbers<[1], [0], [0], [1], [0, 0, 1, 1], [], []>} : vector<8x896xbf16>, vector<896x512xbf16>, vector<8x512xf32> -> vector<8x512xf32>
    %c0_3 = arith.constant 0 : index
    %c0_4 = arith.constant 0 : index
    %3 = vector.load %arg3[%c0_3, %c0_4] : memref<1x512xf32, #tpu.memory_space<vmem>>, vector<1x512xf32>
    %4 = vector.broadcast %3 : vector<1x512xf32> to vector<8x512xf32>
    %5 = arith.addf %2, %4 : vector<8x512xf32>
    %cst_5 = arith.constant 0.000000e+00 : f32
    %6 = vector.broadcast %cst_5 : f32 to vector<8x512xf32>
    %7 = arith.maximumf %5, %6 : vector<8x512xf32>
    %c0_6 = arith.constant 0 : index
    %c0_7 = arith.constant 0 : index
    %8 = vector.load %arg4[%c0_6, %c0_7] : memref<512x128xf32, #tpu.memory_space<vmem>>, vector<512x128xf32>
    %cst_8 = arith.constant dense<0.000000e+00> : vector<8x128xf32>
    %9 = tpu.matmul %7, %8, %cst_8 {dimension_numbers = #tpu.dot_dimension_numbers<[1], [0], [0], [1], [0, 0, 1, 1], [], []>} : vector<8x512xf32>, vector<512x128xf32>, vector<8x128xf32> -> vector<8x128xf32>
    %c0_9 = arith.constant 0 : index
    %c0_10 = arith.constant 0 : index
    %10 = vector.load %arg5[%c0_9, %c0_10] : memref<1x128xf32, #tpu.memory_space<vmem>>, vector<1x128xf32>
    %11 = vector.broadcast %10 : vector<1x128xf32> to vector<8x128xf32>
    %12 = arith.addf %9, %11 : vector<8x128xf32>
    %c0_11 = arith.constant 0 : index
    %c0_12 = arith.constant 0 : index
    %13 = vector.load %arg6[%c0_11, %c0_12] : memref<8x128xf32, #tpu.memory_space<vmem>>, vector<8x128xf32>
    tpu.vector_store %arg6[%c0_11, %c0_12], %12 {strides = array<i32>} : memref<8x128xf32, #tpu.memory_space<vmem>>, vector<8x128xf32>,
    return
  }
  func.func @transform_0(%arg0: i32) -> (i32, i32) {
    %c0_i32 = arith.constant 0 : i32
    %c0_i32_0 = arith.constant 0 : i32
    return %arg0, %c0_i32 : i32, i32
  }
  func.func @transform_1(%arg0: i32) -> (i32, i32) {
    %c0_i32 = arith.constant 0 : i32
    %c0_i32_0 = arith.constant 0 : i32
    %c0_i32_1 = arith.constant 0 : i32
    return %c0_i32, %c0_i32_0 : i32, i32
  }
  func.func @transform_2(%arg0: i32) -> (i32, i32) {
    %c0_i32 = arith.constant 0 : i32
    %c0_i32_0 = arith.constant 0 : i32
    %c0_i32_1 = arith.constant 0 : i32
    return %c0_i32, %c0_i32_0 : i32, i32
  }
  func.func @transform_3(%arg0: i32) -> (i32, i32) {
    %c0_i32 = arith.constant 0 : i32
    %c0_i32_0 = arith.constant 0 : i32
    %c0_i32_1 = arith.constant 0 : i32
    return %c0_i32, %c0_i32_0 : i32, i32
  }
  func.func @transform_4(%arg0: i32) -> (i32, i32) {
    %c0_i32 = arith.constant 0 : i32
    %c0_i32_0 = arith.constant 0 : i32
    %c0_i32_1 = arith.constant 0 : i32
    return %c0_i32, %c0_i32_0 : i32, i32
  }
  func.func @transform_5(%arg0: i32) -> (i32, i32) {
    %c0_i32 = arith.constant 0 : i32
    %c0_i32_0 = arith.constant 0 : i32
    return %arg0, %c0_i32 : i32, i32
  }
}

</mosaic_0001>

<llo_original>
// kernel: tpu_custom_call.1
$region0: #{tpu_custom_call.1}
  #allocation0 [shape = 'u32[]', space=smem, size = 0x4, offset = 0x4, fixed_abs, tag = 'smem constant byte address 0x4 - core index']
  #allocation1 [shape = 'u32[144,128]{1,0:T(1,128)}', space=vmem, size = 0x12000, scoped, tag = 'internal scratch']
  %s0 = inlined_call_operand.hbm [shape: bf16[8,896], index: 0, kind: input, shape index: {}]
  %s1 = inlined_call_operand.hbm [shape: bf16[896,512], index: 1, kind: input, shape index: {}]
  %s2 = inlined_call_operand.vmem [shape: f32[1,512], index: 2, kind: input, shape index: {}]
  %s3 = inlined_call_operand.hbm [shape: f32[512,128], index: 3, kind: input, shape index: {}]
  %s4 = inlined_call_operand.vmem [shape: f32[1,128], index: 4, kind: input, shape index: {}]
  %s5 = inlined_call_operand.hbm [shape: f32[8,128], index: 5, kind: output, shape index: {}]
  %s6 = sld [smem:[#allocation0]]
  $region42: #{tpu_custom_call.1} parent=0
    _
  %s8 = ssub.s32 1, %s6
  %s9 = scalar_select 0, %s8, %s6
  $region1: #{tpu_custom_call.1} parent=0
    #allocation2 [shape = 'u8[14336]{0}', space=vmem, size = 0x3800, scoped, tag = 'input window, operand 0, single buffered']
    #allocation3 [shape = 's32[1]{0}', space=sflag, size = 0x4, scoped, tag = 'scoped memory for tpu_custom_call.1']
    #allocation4 [shape = 's32[1]{0}', space=sflag, size = 0x4, scoped, tag = 'scoped memory for tpu_custom_call.1']
    #allocation5 [shape = 'u8[917504]{0}', space=vmem, size = 0xe0000, scoped, tag = 'input window, operand 1, single buffered']
    #allocation6 [shape = 's32[1]{0}', space=sflag, size = 0x4, scoped, tag = 'scoped memory for tpu_custom_call.1']
    #allocation7 [shape = 'u8[262144]{0}', space=vmem, size = 0x40000, scoped, tag = 'input window, operand 3, single buffered']
    #allocation8 [shape = 'u8[4096]{0}', space=vmem, size = 0x1000, scoped, tag = 'output window, operand 0, single buffered']
    %10 = vsyncpa [#allocation3], 0
    %11 = vsyncpa [#allocation6], 0
    %12 = vsyncpa [#allocation4], 0
    // Predicated region
    $region2: #{tpu_custom_call.1} parent=1 // pred_check
      _
    $region3: #{tpu_custom_call.1} parent=1 // pred_check_branch
      %14 = sbr.rel (0) target = $region5
    $region4: #{tpu_custom_call.1} parent=1 // pred_region
      %s16 = ssub.s32 448, 448
      %17 = vsyncadd [#allocation3], %s16
      %s19 = sshll.u32 [#allocation2], 4
      %s20 = int_to_ptr.vmem [resolvable:$true] %s19
      %22 = dma.hbm_to_vmem [thread:$0]  %s0, 448, %s20, [#allocation3]
    $region5: #{tpu_custom_call.1} parent=1 // pred_fallthru
      _
    // Predicated region
    $region6: #{tpu_custom_call.1} parent=1 // pred_check
      _
    $region7: #{tpu_custom_call.1} parent=1 // pred_check_branch
      %24 = sbr.rel (0) target = $region9
    $region8: #{tpu_custom_call.1} parent=1 // pred_region
      %s26 = ssub.s32 28672, 28672
      %27 = vsyncadd [#allocation6], %s26
      %s28 = sshll.u32 [#allocation5], 4
      %s29 = int_to_ptr.vmem [resolvable:$true] %s28
      %34 = dma.hbm_to_vmem [thread:$0]  %s1, 28672, %s29, [#allocation6], 256, 256, 16
    $region9: #{tpu_custom_call.1} parent=1 // pred_fallthru
      _
    // Predicated region
    $region10: #{tpu_custom_call.1} parent=1 // pred_check
      _
    $region11: #{tpu_custom_call.1} parent=1 // pred_check_branch
      %36 = sbr.rel (0) target = $region13
    $region12: #{tpu_custom_call.1} parent=1 // pred_region
      _
    $region13: #{tpu_custom_call.1} parent=1 // pred_fallthru
      _
    // Predicated region
    $region14: #{tpu_custom_call.1} parent=1 // pred_check
      _
    $region15: #{tpu_custom_call.1} parent=1 // pred_check_branch
      %38 = sbr.rel (0) target = $region17
    $region16: #{tpu_custom_call.1} parent=1 // pred_region
      %s40 = ssub.s32 8192, 8192
      %41 = vsyncadd [#allocation6], %s40
      %s42 = sshll.u32 [#allocation7], 4
      %s43 = int_to_ptr.vmem [resolvable:$true] %s42
      %48 = dma.hbm_to_vmem [thread:$0]  %s3, 8192, %s43, [#allocation6], 128, 128, 8
    $region17: #{tpu_custom_call.1} parent=1 // pred_fallthru
      _
    // Predicated region
    $region18: #{tpu_custom_call.1} parent=1 // pred_check
      _
    $region19: #{tpu_custom_call.1} parent=1 // pred_check_branch
      %50 = sbr.rel (0) target = $region21
    $region20: #{tpu_custom_call.1} parent=1 // pred_region
      _
    $region21: #{tpu_custom_call.1} parent=1 // pred_fallthru
      _
    // Predicated region
    $region22: #{tpu_custom_call.1} parent=1 // pred_check
      _
    $region23: #{tpu_custom_call.1} parent=1 // pred_check_branch
      %52 = sbr.rel (0) target = $region25
    $region24: #{tpu_custom_call.1} parent=1 // pred_region
      %53 = dma.done [#allocation3], 448
    $region25: #{tpu_custom_call.1} parent=1 // pred_fallthru
      _
    // Predicated region
    $region26: #{tpu_custom_call.1} parent=1 // pred_check
      _
    $region27: #{tpu_custom_call.1} parent=1 // pred_check_branch
      %55 = sbr.rel (0) target = $region29
    $region28: #{tpu_custom_call.1} parent=1 // pred_region
      %56 = dma.done [#allocation6], 28672
    $region29: #{tpu_custom_call.1} parent=1 // pred_fallthru
      _
    // Predicated region
    $region30: #{tpu_custom_call.1} parent=1 // pred_check
      _
    $region31: #{tpu_custom_call.1} parent=1 // pred_check_branch
      %58 = sbr.rel (0) target = $region33
    $region32: #{tpu_custom_call.1} parent=1 // pred_region
      %59 = dma.done [#allocation6], 8192
    $region33: #{tpu_custom_call.1} parent=1 // pred_fallthru
      _
    %v61 = vld [vmem:[#allocation2] sm:$0xff]
    %v62 = vld [vmem:[#allocation2 + $0x8] sm:$0xff]
    %v63 = vld [vmem:[#allocation2 + $0x10] sm:$0xff]
    %v64 = vld [vmem:[#allocation2 + $0x18] sm:$0xf]
    %v65 = vld [vmem:[#allocation5] sm:$0xff]
    %v66 = vld [vmem:[#allocation5 + $0x8] sm:$0xff]
    %v67 = vld [vmem:[#allocation5 + $0x10] sm:$0xff]
    %v68 = vld [vmem:[#allocation5 + $0x18] sm:$0xff]
    %v69 = vld [vmem:[#allocation5 + $0x20] sm:$0xff]
    %v70 = vld [vmem:[#allocation5 + $0x28] sm:$0xff]
    %v71 = vld [vmem:[#allocation5 + $0x30] sm:$0xff]
    %v72 = vld [vmem:[#allocation5 + $0x38] sm:$0xff]
    %v73 = vld [vmem:[#allocation5 + $0x40] sm:$0xff]
    %v74 = vld [vmem:[#allocation5 + $0x48] sm:$0xff]
    %v75 = vld [vmem:[#allocation5 + $0x50] sm:$0xff]
    %v76 = vld [vmem:[#allocation5 + $0x58] sm:$0xff]
    %v77 = vld [vmem:[#allocation5 + $0x60] sm:$0xff]
    %v78 = vld [vmem:[#allocation5 + $0x68] sm:$0xff]
    %v79 = vld [vmem:[#allocation5 + $0x70] sm:$0xff]
    %v80 = vld [vmem:[#allocation5 + $0x78] sm:$0xff]
    %v81 = vld [vmem:[#allocation5 + $0x80] sm:$0xff]
    %v82 = vld [vmem:[#allocation5 + $0x88] sm:$0xff]
    %v83 = vld [vmem:[#allocation5 + $0x90] sm:$0xff]
    %v84 = vld [vmem:[#allocation5 + $0x98] sm:$0xff]
    %v85 = vld [vmem:[#allocation5 + $0xa0] sm:$0xff]
    %v86 = vld [vmem:[#allocation5 + $0xa8] sm:$0xff]
    %v87 = vld [vmem:[#allocation5 + $0xb0] sm:$0xff]
    %v88 = vld [vmem:[#allocation5 + $0xb8] sm:$0xff]
    %v89 = vld [vmem:[#allocation5 + $0xc0] sm:$0xff]
    %v90 = vld [vmem:[#allocation5 + $0xc8] sm:$0xff]
    %v91 = vld [vmem:[#allocation5 + $0xd0] sm:$0xff]
    %v92 = vld [vmem:[#allocation5 + $0xd8] sm:$0xff]
    %v93 = vld [vmem:[#allocation5 + $0xe0] sm:$0xff]
    %v94 = vld [vmem:[#allocation5 + $0xe8] sm:$0xff]
    %v95 = vld [vmem:[#allocation5 + $0xf0] sm:$0xff]
    %v96 = vld [vmem:[#allocation5 + $0xf8] sm:$0xff]
    %v97 = vld [vmem:[#allocation5 + $0x100] sm:$0xff]
    %v98 = vld [vmem:[#allocation5 + $0x108] sm:$0xff]
    %v99 = vld [vmem:[#allocation5 + $0x110] sm:$0xff]
    %v100 = vld [vmem:[#allocation5 + $0x118] sm:$0xff]
    %v101 = vld [vmem:[#allocation5 + $0x120] sm:$0xff]
    %v102 = vld [vmem:[#allocation5 + $0x128] sm:$0xff]
    %v103 = vld [vmem:[#allocation5 + $0x130] sm:$0xff]
    %v104 = vld [vmem:[#allocation5 + $0x138] sm:$0xff]
    %v105 = vld [vmem:[#allocation5 + $0x140] sm:$0xff]
    %v106 = vld [vmem:[#allocation5 + $0x148] sm:$0xff]
    %v107 = vld [vmem:[#allocation5 + $0x150] sm:$0xff]
    %v108 = vld [vmem:[#allocation5 + $0x158] sm:$0xff]
    %v109 = vld [vmem:[#allocation5 + $0x160] sm:$0xff]
    %v110 = vld [vmem:[#allocation5 + $0x168] sm:$0xff]
    %v111 = vld [vmem:[#allocation5 + $0x170] sm:$0xff]
    %v112 = vld [vmem:[#allocation5 + $0x178] sm:$0xff]
    %v113 = vld [vmem:[#allocation5 + $0x180] sm:$0xff]
    %v114 = vld [vmem:[#allocation5 + $0x188] sm:$0xff]
    %v115 = vld [vmem:[#allocation5 + $0x190] sm:$0xff]
    %v116 = vld [vmem:[#allocation5 + $0x198] sm:$0xff]
    %v117 = vld [vmem:[#allocation5 + $0x1a0] sm:$0xff]
    %v118 = vld [vmem:[#allocation5 + $0x1a8] sm:$0xff]
    %v119 = vld [vmem:[#allocation5 + $0x1b0] sm:$0xff]
    %v120 = vld [vmem:[#allocation5 + $0x1b8] sm:$0xff]
    %v121 = vld [vmem:[#allocation5 + $0x1c0] sm:$0xff]
    %v122 = vld [vmem:[#allocation5 + $0x1c8] sm:$0xff]
    %v123 = vld [vmem:[#allocation5 + $0x1d0] sm:$0xff]
    %v124 = vld [vmem:[#allocation5 + $0x1d8] sm:$0xff]
    %v125 = vld [vmem:[#allocation5 + $0x1e0] sm:$0xff]
    %v126 = vld [vmem:[#allocation5 + $0x1e8] sm:$0xff]
    %v127 = vld [vmem:[#allocation5 + $0x1f0] sm:$0xff]
    %v128 = vld [vmem:[#allocation5 + $0x1f8] sm:$0xff]
    %v129 = vld [vmem:[#allocation5 + $0x200] sm:$0xff]
    %v130 = vld [vmem:[#allocation5 + $0x208] sm:$0xff]
    %v131 = vld [vmem:[#allocation5 + $0x210] sm:$0xff]
    %v132 = vld [vmem:[#allocation5 + $0x218] sm:$0xff]
    %v133 = vld [vmem:[#allocation5 + $0x220] sm:$0xff]
    %v134 = vld [vmem:[#allocation5 + $0x228] sm:$0xff]
    %v135 = vld [vmem:[#allocation5 + $0x230] sm:$0xff]
    %v136 = vld [vmem:[#allocation5 + $0x238] sm:$0xff]
    %v137 = vld [vmem:[#allocation5 + $0x240] sm:$0xff]
    %v138 = vld [vmem:[#allocation5 + $0x248] sm:$0xff]
    %v139 = vld [vmem:[#allocation5 + $0x250] sm:$0xff]
    %v140 = vld [vmem:[#allocation5 + $0x258] sm:$0xff]
    %v141 = vld [vmem:[#allocation5 + $0x260] sm:$0xff]
    %v142 = vld [vmem:[#allocation5 + $0x268] sm:$0xff]
    %v143 = vld [vmem:[#allocation5 + $0x270] sm:$0xff]
    %v144 = vld [vmem:[#allocation5 + $0x278] sm:$0xff]
    %v145 = vld [vmem:[#allocation5 + $0x280] sm:$0xff]
    %v146 = vld [vmem:[#allocation5 + $0x288] sm:$0xff]
    %v147 = vld [vmem:[#allocation5 + $0x290] sm:$0xff]
    %v148 = vld [vmem:[#allocation5 + $0x298] sm:$0xff]
    %v149 = vld [vmem:[#allocation5 + $0x2a0] sm:$0xff]
    %v150 = vld [vmem:[#allocation5 + $0x2a8] sm:$0xff]
    %v151 = vld [vmem:[#allocation5 + $0x2b0] sm:$0xff]
    %v152 = vld [vmem:[#allocation5 + $0x2b8] sm:$0xff]
    %v153 = vld [vmem:[#allocation5 + $0x2c0] sm:$0xff]
    %v154 = vld [vmem:[#allocation5 + $0x2c8] sm:$0xff]
    %v155 = vld [vmem:[#allocation5 + $0x2d0] sm:$0xff]
    %v156 = vld [vmem:[#allocation5 + $0x2d8] sm:$0xff]
    %v157 = vld [vmem:[#allocation5 + $0x2e0] sm:$0xff]
    %v158 = vld [vmem:[#allocation5 + $0x2e8] sm:$0xff]
    %v159 = vld [vmem:[#allocation5 + $0x2f0] sm:$0xff]
    %v160 = vld [vmem:[#allocation5 + $0x2f8] sm:$0xff]
    %v161 = vld [vmem:[#allocation5 + $0x300] sm:$0xff]
    %v162 = vld [vmem:[#allocation5 + $0x308] sm:$0xff]
    %v163 = vld [vmem:[#allocation5 + $0x310] sm:$0xff]
    %v164 = vld [vmem:[#allocation5 + $0x318] sm:$0xff]
    %v165 = vld [vmem:[#allocation5 + $0x320] sm:$0xff]
    %v166 = vld [vmem:[#allocation5 + $0x328] sm:$0xff]
    %v167 = vld [vmem:[#allocation5 + $0x330] sm:$0xff]
    %v168 = vld [vmem:[#allocation5 + $0x338] sm:$0xff]
    %v169 = vld [vmem:[#allocation5 + $0x340] sm:$0xff]
    %v170 = vld [vmem:[#allocation5 + $0x348] sm:$0xff]
    %v171 = vld [vmem:[#allocation5 + $0x350] sm:$0xff]
    %v172 = vld [vmem:[#allocation5 + $0x358] sm:$0xff]
    %v173 = vld [vmem:[#allocation5 + $0x360] sm:$0xff]
    %v174 = vld [vmem:[#allocation5 + $0x368] sm:$0xff]
    %v175 = vld [vmem:[#allocation5 + $0x370] sm:$0xff]
    %v176 = vld [vmem:[#allocation5 + $0x378] sm:$0xff]
    %v177 = vld [vmem:[#allocation5 + $0x380] sm:$0xff]
    %v178 = vld [vmem:[#allocation5 + $0x388] sm:$0xff]
    %v179 = vld [vmem:[#allocation5 + $0x390] sm:$0xff]
    %v180 = vld [vmem:[#allocation5 + $0x398] sm:$0xff]
    %v181 = vld [vmem:[#allocation5 + $0x3a0] sm:$0xff]
    %v182 = vld [vmem:[#allocation5 + $0x3a8] sm:$0xff]
    %v183 = vld [vmem:[#allocation5 + $0x3b0] sm:$0xff]
    %v184 = vld [vmem:[#allocation5 + $0x3b8] sm:$0xff]
    %v185 = vld [vmem:[#allocation5 + $0x3c0] sm:$0xff]
    %v186 = vld [vmem:[#allocation5 + $0x3c8] sm:$0xff]
    %v187 = vld [vmem:[#allocation5 + $0x3d0] sm:$0xff]
    %v188 = vld [vmem:[#allocation5 + $0x3d8] sm:$0xff]
    %v189 = vld [vmem:[#allocation5 + $0x3e0] sm:$0xff]
    %v190 = vld [vmem:[#allocation5 + $0x3e8] sm:$0xff]
    %v191 = vld [vmem:[#allocation5 + $0x3f0] sm:$0xff]
    %v192 = vld [vmem:[#allocation5 + $0x3f8] sm:$0xff]
    %v193 = vld [vmem:[#allocation5 + $0x400] sm:$0xff]
    %v194 = vld [vmem:[#allocation5 + $0x408] sm:$0xff]
    %v195 = vld [vmem:[#allocation5 + $0x410] sm:$0xff]
    %v196 = vld [vmem:[#allocation5 + $0x418] sm:$0xff]
    %v197 = vld [vmem:[#allocation5 + $0x420] sm:$0xff]
    %v198 = vld [vmem:[#allocation5 + $0x428] sm:$0xff]
    %v199 = vld [vmem:[#allocation5 + $0x430] sm:$0xff]
    %v200 = vld [vmem:[#allocation5 + $0x438] sm:$0xff]
    %v201 = vld [vmem:[#allocation5 + $0x440] sm:$0xff]
    %v202 = vld [vmem:[#allocation5 + $0x448] sm:$0xff]
    %v203 = vld [vmem:[#allocation5 + $0x450] sm:$0xff]
    %v204 = vld [vmem:[#allocation5 + $0x458] sm:$0xff]
    %v205 = vld [vmem:[#allocation5 + $0x460] sm:$0xff]
    %v206 = vld [vmem:[#allocation5 + $0x468] sm:$0xff]
    %v207 = vld [vmem:[#allocation5 + $0x470] sm:$0xff]
    %v208 = vld [vmem:[#allocation5 + $0x478] sm:$0xff]
    %v209 = vld [vmem:[#allocation5 + $0x480] sm:$0xff]
    %v210 = vld [vmem:[#allocation5 + $0x488] sm:$0xff]
    %v211 = vld [vmem:[#allocation5 + $0x490] sm:$0xff]
    %v212 = vld [vmem:[#allocation5 + $0x498] sm:$0xff]
    %v213 = vld [vmem:[#allocation5 + $0x4a0] sm:$0xff]
    %v214 = vld [vmem:[#allocation5 + $0x4a8] sm:$0xff]
    %v215 = vld [vmem:[#allocation5 + $0x4b0] sm:$0xff]
    %v216 = vld [vmem:[#allocation5 + $0x4b8] sm:$0xff]
    %v217 = vld [vmem:[#allocation5 + $0x4c0] sm:$0xff]
    %v218 = vld [vmem:[#allocation5 + $0x4c8] sm:$0xff]
    %v219 = vld [vmem:[#allocation5 + $0x4d0] sm:$0xff]
    %v220 = vld [vmem:[#allocation5 + $0x4d8] sm:$0xff]
    %v221 = vld [vmem:[#allocation5 + $0x4e0] sm:$0xff]
    %v222 = vld [vmem:[#allocation5 + $0x4e8] sm:$0xff]
    %v223 = vld [vmem:[#allocation5 + $0x4f0] sm:$0xff]
    %v224 = vld [vmem:[#allocation5 + $0x4f8] sm:$0xff]
    %v225 = vld [vmem:[#allocation5 + $0x500] sm:$0xff]
    %v226 = vld [vmem:[#allocation5 + $0x508] sm:$0xff]
    %v227 = vld [vmem:[#allocation5 + $0x510] sm:$0xff]
    %v228 = vld [vmem:[#allocation5 + $0x518] sm:$0xff]
    %v229 = vld [vmem:[#allocation5 + $0x520] sm:$0xff]
    %v230 = vld [vmem:[#allocation5 + $0x528] sm:$0xff]
    %v231 = vld [vmem:[#allocation5 + $0x530] sm:$0xff]
    %v232 = vld [vmem:[#allocation5 + $0x538] sm:$0xff]
    %v233 = vld [vmem:[#allocation5 + $0x540] sm:$0xff]
    %v234 = vld [vmem:[#allocation5 + $0x548] sm:$0xff]
    %v235 = vld [vmem:[#allocation5 + $0x550] sm:$0xff]
    %v236 = vld [vmem:[#allocation5 + $0x558] sm:$0xff]
    %v237 = vld [vmem:[#allocation5 + $0x560] sm:$0xff]
    %v238 = vld [vmem:[#allocation5 + $0x568] sm:$0xff]
    %v239 = vld [vmem:[#allocation5 + $0x570] sm:$0xff]
    %v240 = vld [vmem:[#allocation5 + $0x578] sm:$0xff]
    %v241 = vld [vmem:[#allocation5 + $0x580] sm:$0xff]
    %v242 = vld [vmem:[#allocation5 + $0x588] sm:$0xff]
    %v243 = vld [vmem:[#allocation5 + $0x590] sm:$0xff]
    %v244 = vld [vmem:[#allocation5 + $0x598] sm:$0xff]
    %v245 = vld [vmem:[#allocation5 + $0x5a0] sm:$0xff]
    %v246 = vld [vmem:[#allocation5 + $0x5a8] sm:$0xff]
    %v247 = vld [vmem:[#allocation5 + $0x5b0] sm:$0xff]
    %v248 = vld [vmem:[#allocation5 + $0x5b8] sm:$0xff]
    %v249 = vld [vmem:[#allocation5 + $0x5c0] sm:$0xff]
    %v250 = vld [vmem:[#allocation5 + $0x5c8] sm:$0xff]
    %v251 = vld [vmem:[#allocation5 + $0x5d0] sm:$0xff]
    %v252 = vld [vmem:[#allocation5 + $0x5d8] sm:$0xff]
    %v253 = vld [vmem:[#allocation5 + $0x5e0] sm:$0xff]
    %v254 = vld [vmem:[#allocation5 + $0x5e8] sm:$0xff]
    %v255 = vld [vmem:[#allocation5 + $0x5f0] sm:$0xff]
    %v256 = vld [vmem:[#allocation5 + $0x5f8] sm:$0xff]
    %v257 = vld [vmem:[#allocation5 + $0x600] sm:$0xff]
    %v258 = vld [vmem:[#allocation5 + $0x608] sm:$0xff]
    %v259 = vld [vmem:[#allocation5 + $0x610] sm:$0xff]
    %v260 = vld [vmem:[#allocation5 + $0x618] sm:$0xff]
    %v261 = vld [vmem:[#allocation5 + $0x620] sm:$0xff]
    %v262 = vld [vmem:[#allocation5 + $0x628] sm:$0xff]
    %v263 = vld [vmem:[#allocation5 + $0x630] sm:$0xff]
    %v264 = vld [vmem:[#allocation5 + $0x638] sm:$0xff]
    %v265 = vld [vmem:[#allocation5 + $0x640] sm:$0xff]
    %v266 = vld [vmem:[#allocation5 + $0x648] sm:$0xff]
    %v267 = vld [vmem:[#allocation5 + $0x650] sm:$0xff]
    %v268 = vld [vmem:[#allocation5 + $0x658] sm:$0xff]
    %v269 = vld [vmem:[#allocation5 + $0x660] sm:$0xff]
    %v270 = vld [vmem:[#allocation5 + $0x668] sm:$0xff]
    %v271 = vld [vmem:[#allocation5 + $0x670] sm:$0xff]
    %v272 = vld [vmem:[#allocation5 + $0x678] sm:$0xff]
    %v273 = vld [vmem:[#allocation5 + $0x680] sm:$0xff]
    %v274 = vld [vmem:[#allocation5 + $0x688] sm:$0xff]
    %v275 = vld [vmem:[#allocation5 + $0x690] sm:$0xff]
    %v276 = vld [vmem:[#allocation5 + $0x698] sm:$0xff]
    %v277 = vld [vmem:[#allocation5 + $0x6a0] sm:$0xff]
    %v278 = vld [vmem:[#allocation5 + $0x6a8] sm:$0xff]
    %v279 = vld [vmem:[#allocation5 + $0x6b0] sm:$0xff]
    %v280 = vld [vmem:[#allocation5 + $0x6b8] sm:$0xff]
    %v281 = vld [vmem:[#allocation5 + $0x6c0] sm:$0xff]
    %v282 = vld [vmem:[#allocation5 + $0x6c8] sm:$0xff]
    %v283 = vld [vmem:[#allocation5 + $0x6d0] sm:$0xff]
    %v284 = vld [vmem:[#allocation5 + $0x6d8] sm:$0xff]
    %v285 = vld [vmem:[#allocation5 + $0x6e0] sm:$0xff]
    %v286 = vld [vmem:[#allocation5 + $0x6e8] sm:$0xff]
    %v287 = vld [vmem:[#allocation5 + $0x6f0] sm:$0xff]
    %v288 = vld [vmem:[#allocation5 + $0x6f8] sm:$0xff]
    %v289 = vld [vmem:[%s2] sm:$0xf]
    %v291 = vlaneseq
    %v292 = vshrl.u32 %v291, 7
    %v293 = vsub.s32 0, %v292
    %v294 = vrot.slane %v289, %v293
    %v295 = vlaneseq
    %v296 = vshrl.u32 %v295, 7
    %v297 = vsub.s32 1, %v296
    %v298 = vrot.slane %v289, %v297
    %v299 = vlaneseq
    %v300 = vshrl.u32 %v299, 7
    %v301 = vsub.s32 2, %v300
    %v302 = vrot.slane %v289, %v301
    %v303 = vlaneseq
    %v304 = vshrl.u32 %v303, 7
    %v305 = vsub.s32 3, %v304
    %v306 = vrot.slane %v289, %v305
    %v315 = vunpack.c.l.b16 %v61
    %v316 = vunpack.c.h.b16 %v61
    %v317 = vunpack.c.l.b16 %v62
    %v318 = vunpack.c.h.b16 %v62
    %v319 = vunpack.c.l.b16 %v63
    %v320 = vunpack.c.h.b16 %v63
    %v321 = vunpack.c.l.b16 %v64
    %v322 = vpack.c.b16 %v315, %v315
    %v323 = vpack.c.b16 %v316, %v316
    %v324 = vpack.c.b16 %v317, %v317
    %v325 = vpack.c.b16 %v318, %v318
    %v326 = vpack.c.b16 %v319, %v319
    %v327 = vpack.c.b16 %v320, %v320
    %v328 = vpack.c.b16 %v321, %v321
    %v560 = vunpack.c.l.b16 %v65
    %v561 = vunpack.c.h.b16 %v65
    %v562 = vunpack.c.l.b16 %v66
    %v563 = vunpack.c.h.b16 %v66
    %v564 = vunpack.c.l.b16 %v67
    %v565 = vunpack.c.h.b16 %v67
    %v566 = vunpack.c.l.b16 %v68
    %v567 = vunpack.c.h.b16 %v68
    %v568 = vunpack.c.l.b16 %v69
    %v569 = vunpack.c.h.b16 %v69
    %v570 = vunpack.c.l.b16 %v70
    %v571 = vunpack.c.h.b16 %v70
    %v572 = vunpack.c.l.b16 %v71
    %v573 = vunpack.c.h.b16 %v71
    %v574 = vunpack.c.l.b16 %v72
    %v575 = vunpack.c.h.b16 %v72
    %v576 = vunpack.c.l.b16 %v73
    %v577 = vunpack.c.h.b16 %v73
    %v578 = vunpack.c.l.b16 %v74
    %v579 = vunpack.c.h.b16 %v74
    %v580 = vunpack.c.l.b16 %v75
    %v581 = vunpack.c.h.b16 %v75
    %v582 = vunpack.c.l.b16 %v76
    %v583 = vunpack.c.h.b16 %v76
    %v584 = vunpack.c.l.b16 %v77
    %v585 = vunpack.c.h.b16 %v77
    %v586 = vunpack.c.l.b16 %v78
    %v587 = vunpack.c.h.b16 %v78
    %v588 = vunpack.c.l.b16 %v79
    %v589 = vunpack.c.h.b16 %v79
    %v590 = vunpack.c.l.b16 %v80
    %v591 = vunpack.c.h.b16 %v80
    %v592 = vunpack.c.l.b16 %v81
    %v593 = vunpack.c.h.b16 %v81
    %v594 = vunpack.c.l.b16 %v82
    %v595 = vunpack.c.h.b16 %v82
    %v596 = vunpack.c.l.b16 %v83
    %v597 = vunpack.c.h.b16 %v83
    %v598 = vunpack.c.l.b16 %v84
    %v599 = vunpack.c.h.b16 %v84
    %v600 = vunpack.c.l.b16 %v85
    %v601 = vunpack.c.h.b16 %v85
    %v602 = vunpack.c.l.b16 %v86
    %v603 = vunpack.c.h.b16 %v86
    %v604 = vunpack.c.l.b16 %v87
    %v605 = vunpack.c.h.b16 %v87
    %v606 = vunpack.c.l.b16 %v88
    %v607 = vunpack.c.h.b16 %v88
    %v608 = vunpack.c.l.b16 %v89
    %v609 = vunpack.c.h.b16 %v89
    %v610 = vunpack.c.l.b16 %v90
    %v611 = vunpack.c.h.b16 %v90
    %v612 = vunpack.c.l.b16 %v91
    %v613 = vunpack.c.h.b16 %v91
    %v614 = vunpack.c.l.b16 %v92
    %v615 = vunpack.c.h.b16 %v92
    %v616 = vunpack.c.l.b16 %v93
    %v617 = vunpack.c.h.b16 %v93
    %v618 = vunpack.c.l.b16 %v94
    %v619 = vunpack.c.h.b16 %v94
    %v620 = vunpack.c.l.b16 %v95
    %v621 = vunpack.c.h.b16 %v95
    %v622 = vunpack.c.l.b16 %v96
    %v623 = vunpack.c.h.b16 %v96
    %v624 = vunpack.c.l.b16 %v97
    %v625 = vunpack.c.h.b16 %v97
    %v626 = vunpack.c.l.b16 %v98
    %v627 = vunpack.c.h.b16 %v98
    %v628 = vunpack.c.l.b16 %v99
    %v629 = vunpack.c.h.b16 %v99
    %v630 = vunpack.c.l.b16 %v100
    %v631 = vunpack.c.h.b16 %v100
    %v632 = vunpack.c.l.b16 %v101
    %v633 = vunpack.c.h.b16 %v101
    %v634 = vunpack.c.l.b16 %v102
    %v635 = vunpack.c.h.b16 %v102
    %v636 = vunpack.c.l.b16 %v103
    %v637 = vunpack.c.h.b16 %v103
    %v638 = vunpack.c.l.b16 %v104
    %v639 = vunpack.c.h.b16 %v104
    %v640 = vunpack.c.l.b16 %v105
    %v641 = vunpack.c.h.b16 %v105
    %v642 = vunpack.c.l.b16 %v106
    %v643 = vunpack.c.h.b16 %v106
    %v644 = vunpack.c.l.b16 %v107
    %v645 = vunpack.c.h.b16 %v107
    %v646 = vunpack.c.l.b16 %v108
    %v647 = vunpack.c.h.b16 %v108
    %v648 = vunpack.c.l.b16 %v109
    %v649 = vunpack.c.h.b16 %v109
    %v650 = vunpack.c.l.b16 %v110
    %v651 = vunpack.c.h.b16 %v110
    %v652 = vunpack.c.l.b16 %v111
    %v653 = vunpack.c.h.b16 %v111
    %v654 = vunpack.c.l.b16 %v112
    %v655 = vunpack.c.h.b16 %v112
    %v656 = vunpack.c.l.b16 %v113
    %v657 = vunpack.c.h.b16 %v113
    %v658 = vunpack.c.l.b16 %v114
    %v659 = vunpack.c.h.b16 %v114
    %v660 = vunpack.c.l.b16 %v115
    %v661 = vunpack.c.h.b16 %v115
    %v662 = vunpack.c.l.b16 %v116
    %v663 = vunpack.c.h.b16 %v116
    %v664 = vunpack.c.l.b16 %v117
    %v665 = vunpack.c.h.b16 %v117
    %v666 = vunpack.c.l.b16 %v118
    %v667 = vunpack.c.h.b16 %v118
    %v668 = vunpack.c.l.b16 %v119
    %v669 = vunpack.c.h.b16 %v119
    %v670 = vunpack.c.l.b16 %v120
    %v671 = vunpack.c.h.b16 %v120
    %v672 = vunpack.c.l.b16 %v121
    %v673 = vunpack.c.h.b16 %v121
    %v674 = vunpack.c.l.b16 %v122
    %v675 = vunpack.c.h.b16 %v122
    %v676 = vunpack.c.l.b16 %v123
    %v677 = vunpack.c.h.b16 %v123
    %v678 = vunpack.c.l.b16 %v124
    %v679 = vunpack.c.h.b16 %v124
    %v680 = vunpack.c.l.b16 %v125
    %v681 = vunpack.c.h.b16 %v125
    %v682 = vunpack.c.l.b16 %v126
    %v683 = vunpack.c.h.b16 %v126
    %v684 = vunpack.c.l.b16 %v127
    %v685 = vunpack.c.h.b16 %v127
    %v686 = vunpack.c.l.b16 %v128
    %v687 = vunpack.c.h.b16 %v128
    %v688 = vunpack.c.l.b16 %v129
    %v689 = vunpack.c.h.b16 %v129
    %v690 = vunpack.c.l.b16 %v130
    %v691 = vunpack.c.h.b16 %v130
    %v692 = vunpack.c.l.b16 %v131
    %v693 = vunpack.c.h.b16 %v131
    %v694 = vunpack.c.l.b16 %v132
    %v695 = vunpack.c.h.b16 %v132
    %v696 = vunpack.c.l.b16 %v133
    %v697 = vunpack.c.h.b16 %v133
    %v698 = vunpack.c.l.b16 %v134
    %v699 = vunpack.c.h.b16 %v134
    %v700 = vunpack.c.l.b16 %v135
    %v701 = vunpack.c.h.b16 %v135
    %v702 = vunpack.c.l.b16 %v136
    %v703 = vunpack.c.h.b16 %v136
    %v704 = vunpack.c.l.b16 %v137
    %v705 = vunpack.c.h.b16 %v137
    %v706 = vunpack.c.l.b16 %v138
    %v707 = vunpack.c.h.b16 %v138
    %v708 = vunpack.c.l.b16 %v139
    %v709 = vunpack.c.h.b16 %v139
    %v710 = vunpack.c.l.b16 %v140
    %v711 = vunpack.c.h.b16 %v140
    %v712 = vunpack.c.l.b16 %v141
    %v713 = vunpack.c.h.b16 %v141
    %v714 = vunpack.c.l.b16 %v142
    %v715 = vunpack.c.h.b16 %v142
    %v716 = vunpack.c.l.b16 %v143
    %v717 = vunpack.c.h.b16 %v143
    %v718 = vunpack.c.l.b16 %v144
    %v719 = vunpack.c.h.b16 %v144
    %v720 = vunpack.c.l.b16 %v145
    %v721 = vunpack.c.h.b16 %v145
    %v722 = vunpack.c.l.b16 %v146
    %v723 = vunpack.c.h.b16 %v146
    %v724 = vunpack.c.l.b16 %v147
    %v725 = vunpack.c.h.b16 %v147
    %v726 = vunpack.c.l.b16 %v148
    %v727 = vunpack.c.h.b16 %v148
    %v728 = vunpack.c.l.b16 %v149
    %v729 = vunpack.c.h.b16 %v149
    %v730 = vunpack.c.l.b16 %v150
    %v731 = vunpack.c.h.b16 %v150
    %v732 = vunpack.c.l.b16 %v151
    %v733 = vunpack.c.h.b16 %v151
    %v734 = vunpack.c.l.b16 %v152
    %v735 = vunpack.c.h.b16 %v152
    %v736 = vunpack.c.l.b16 %v153
    %v737 = vunpack.c.h.b16 %v153
    %v738 = vunpack.c.l.b16 %v154
    %v739 = vunpack.c.h.b16 %v154
    %v740 = vunpack.c.l.b16 %v155
    %v741 = vunpack.c.h.b16 %v155
    %v742 = vunpack.c.l.b16 %v156
    %v743 = vunpack.c.h.b16 %v156
    %v744 = vunpack.c.l.b16 %v157
    %v745 = vunpack.c.h.b16 %v157
    %v746 = vunpack.c.l.b16 %v158
    %v747 = vunpack.c.h.b16 %v158
    %v748 = vunpack.c.l.b16 %v159
    %v749 = vunpack.c.h.b16 %v159
    %v750 = vunpack.c.l.b16 %v160
    %v751 = vunpack.c.h.b16 %v160
    %v752 = vunpack.c.l.b16 %v161
    %v753 = vunpack.c.h.b16 %v161
    %v754 = vunpack.c.l.b16 %v162
    %v755 = vunpack.c.h.b16 %v162
    %v756 = vunpack.c.l.b16 %v163
    %v757 = vunpack.c.h.b16 %v163
    %v758 = vunpack.c.l.b16 %v164
    %v759 = vunpack.c.h.b16 %v164
    %v760 = vunpack.c.l.b16 %v165
    %v761 = vunpack.c.h.b16 %v165
    %v762 = vunpack.c.l.b16 %v166
    %v763 = vunpack.c.h.b16 %v166
    %v764 = vunpack.c.l.b16 %v167
    %v765 = vunpack.c.h.b16 %v167
    %v766 = vunpack.c.l.b16 %v168
    %v767 = vunpack.c.h.b16 %v168
    %v768 = vunpack.c.l.b16 %v169
    %v769 = vunpack.c.h.b16 %v169
    %v770 = vunpack.c.l.b16 %v170
    %v771 = vunpack.c.h.b16 %v170
    %v772 = vunpack.c.l.b16 %v171
    %v773 = vunpack.c.h.b16 %v171
    %v774 = vunpack.c.l.b16 %v172
    %v775 = vunpack.c.h.b16 %v172
    %v776 = vunpack.c.l.b16 %v173
    %v777 = vunpack.c.h.b16 %v173
    %v778 = vunpack.c.l.b16 %v174
    %v779 = vunpack.c.h.b16 %v174
    %v780 = vunpack.c.l.b16 %v175
    %v781 = vunpack.c.h.b16 %v175
    %v782 = vunpack.c.l.b16 %v176
    %v783 = vunpack.c.h.b16 %v176
    %v784 = vunpack.c.l.b16 %v177
    %v785 = vunpack.c.h.b16 %v177
    %v786 = vunpack.c.l.b16 %v178
    %v787 = vunpack.c.h.b16 %v178
    %v788 = vunpack.c.l.b16 %v179
    %v789 = vunpack.c.h.b16 %v179
    %v790 = vunpack.c.l.b16 %v180
    %v791 = vunpack.c.h.b16 %v180
    %v792 = vunpack.c.l.b16 %v181
    %v793 = vunpack.c.h.b16 %v181
    %v794 = vunpack.c.l.b16 %v182
    %v795 = vunpack.c.h.b16 %v182
    %v796 = vunpack.c.l.b16 %v183
    %v797 = vunpack.c.h.b16 %v183
    %v798 = vunpack.c.l.b16 %v184
    %v799 = vunpack.c.h.b16 %v184
    %v800 = vunpack.c.l.b16 %v185
    %v801 = vunpack.c.h.b16 %v185
    %v802 = vunpack.c.l.b16 %v186
    %v803 = vunpack.c.h.b16 %v186
    %v804 = vunpack.c.l.b16 %v187
    %v805 = vunpack.c.h.b16 %v187
    %v806 = vunpack.c.l.b16 %v188
    %v807 = vunpack.c.h.b16 %v188
    %v808 = vunpack.c.l.b16 %v189
    %v809 = vunpack.c.h.b16 %v189
    %v810 = vunpack.c.l.b16 %v190
    %v811 = vunpack.c.h.b16 %v190
    %v812 = vunpack.c.l.b16 %v191
    %v813 = vunpack.c.h.b16 %v191
    %v814 = vunpack.c.l.b16 %v192
    %v815 = vunpack.c.h.b16 %v192
    %v816 = vunpack.c.l.b16 %v193
    %v817 = vunpack.c.h.b16 %v193
    %v818 = vunpack.c.l.b16 %v194
    %v819 = vunpack.c.h.b16 %v194
    %v820 = vunpack.c.l.b16 %v195
    %v821 = vunpack.c.h.b16 %v195
    %v822 = vunpack.c.l.b16 %v196
    %v823 = vunpack.c.h.b16 %v196
    %v824 = vunpack.c.l.b16 %v197
    %v825 = vunpack.c.h.b16 %v197
    %v826 = vunpack.c.l.b16 %v198
    %v827 = vunpack.c.h.b16 %v198
    %v828 = vunpack.c.l.b16 %v199
    %v829 = vunpack.c.h.b16 %v199
    %v830 = vunpack.c.l.b16 %v200
    %v831 = vunpack.c.h.b16 %v200
    %v832 = vunpack.c.l.b16 %v201
    %v833 = vunpack.c.h.b16 %v201
    %v834 = vunpack.c.l.b16 %v202
    %v835 = vunpack.c.h.b16 %v202
    %v836 = vunpack.c.l.b16 %v203
    %v837 = vunpack.c.h.b16 %v203
    %v838 = vunpack.c.l.b16 %v204
    %v839 = vunpack.c.h.b16 %v204
    %v840 = vunpack.c.l.b16 %v205
    %v841 = vunpack.c.h.b16 %v205
    %v842 = vunpack.c.l.b16 %v206
    %v843 = vunpack.c.h.b16 %v206
    %v844 = vunpack.c.l.b16 %v207
    %v845 = vunpack.c.h.b16 %v207
    %v846 = vunpack.c.l.b16 %v208
    %v847 = vunpack.c.h.b16 %v208
    %v848 = vunpack.c.l.b16 %v209
    %v849 = vunpack.c.h.b16 %v209
    %v850 = vunpack.c.l.b16 %v210
    %v851 = vunpack.c.h.b16 %v210
    %v852 = vunpack.c.l.b16 %v211
    %v853 = vunpack.c.h.b16 %v211
    %v854 = vunpack.c.l.b16 %v212
    %v855 = vunpack.c.h.b16 %v212
    %v856 = vunpack.c.l.b16 %v213
    %v857 = vunpack.c.h.b16 %v213
    %v858 = vunpack.c.l.b16 %v214
    %v859 = vunpack.c.h.b16 %v214
    %v860 = vunpack.c.l.b16 %v215
    %v861 = vunpack.c.h.b16 %v215
    %v862 = vunpack.c.l.b16 %v216
    %v863 = vunpack.c.h.b16 %v216
    %v864 = vunpack.c.l.b16 %v217
    %v865 = vunpack.c.h.b16 %v217
    %v866 = vunpack.c.l.b16 %v218
    %v867 = vunpack.c.h.b16 %v218
    %v868 = vunpack.c.l.b16 %v219
    %v869 = vunpack.c.h.b16 %v219
    %v870 = vunpack.c.l.b16 %v220
    %v871 = vunpack.c.h.b16 %v220
    %v872 = vunpack.c.l.b16 %v221
    %v873 = vunpack.c.h.b16 %v221
    %v874 = vunpack.c.l.b16 %v222
    %v875 = vunpack.c.h.b16 %v222
    %v876 = vunpack.c.l.b16 %v223
    %v877 = vunpack.c.h.b16 %v223
    %v878 = vunpack.c.l.b16 %v224
    %v879 = vunpack.c.h.b16 %v224
    %v880 = vunpack.c.l.b16 %v225
    %v881 = vunpack.c.h.b16 %v225
    %v882 = vunpack.c.l.b16 %v226
    %v883 = vunpack.c.h.b16 %v226
    %v884 = vunpack.c.l.b16 %v227
    %v885 = vunpack.c.h.b16 %v227
    %v886 = vunpack.c.l.b16 %v228
    %v887 = vunpack.c.h.b16 %v228
    %v888 = vunpack.c.l.b16 %v229
    %v889 = vunpack.c.h.b16 %v229
    %v890 = vunpack.c.l.b16 %v230
    %v891 = vunpack.c.h.b16 %v230
    %v892 = vunpack.c.l.b16 %v231
    %v893 = vunpack.c.h.b16 %v231
    %v894 = vunpack.c.l.b16 %v232
    %v895 = vunpack.c.h.b16 %v232
    %v896 = vunpack.c.l.b16 %v233
    %v897 = vunpack.c.h.b16 %v233
    %v898 = vunpack.c.l.b16 %v234
    %v899 = vunpack.c.h.b16 %v234
    %v900 = vunpack.c.l.b16 %v235
    %v901 = vunpack.c.h.b16 %v235
    %v902 = vunpack.c.l.b16 %v236
    %v903 = vunpack.c.h.b16 %v236
    %v904 = vunpack.c.l.b16 %v237
    %v905 = vunpack.c.h.b16 %v237
    %v906 = vunpack.c.l.b16 %v238
    %v907 = vunpack.c.h.b16 %v238
    %v908 = vunpack.c.l.b16 %v239
    %v909 = vunpack.c.h.b16 %v239
    %v910 = vunpack.c.l.b16 %v240
    %v911 = vunpack.c.h.b16 %v240
    %v912 = vunpack.c.l.b16 %v241
    %v913 = vunpack.c.h.b16 %v241
    %v914 = vunpack.c.l.b16 %v242
    %v915 = vunpack.c.h.b16 %v242
    %v916 = vunpack.c.l.b16 %v243
    %v917 = vunpack.c.h.b16 %v243
    %v918 = vunpack.c.l.b16 %v244
    %v919 = vunpack.c.h.b16 %v244
    %v920 = vunpack.c.l.b16 %v245
    %v921 = vunpack.c.h.b16 %v245
    %v922 = vunpack.c.l.b16 %v246
    %v923 = vunpack.c.h.b16 %v246
    %v924 = vunpack.c.l.b16 %v247
    %v925 = vunpack.c.h.b16 %v247
    %v926 = vunpack.c.l.b16 %v248
    %v927 = vunpack.c.h.b16 %v248
    %v928 = vunpack.c.l.b16 %v249
    %v929 = vunpack.c.h.b16 %v249
    %v930 = vunpack.c.l.b16 %v250
    %v931 = vunpack.c.h.b16 %v250
    %v932 = vunpack.c.l.b16 %v251
    %v933 = vunpack.c.h.b16 %v251
    %v934 = vunpack.c.l.b16 %v252
    %v935 = vunpack.c.h.b16 %v252
    %v936 = vunpack.c.l.b16 %v253
    %v937 = vunpack.c.h.b16 %v253
    %v938 = vunpack.c.l.b16 %v254
    %v939 = vunpack.c.h.b16 %v254
    %v940 = vunpack.c.l.b16 %v255
    %v941 = vunpack.c.h.b16 %v255
    %v942 = vunpack.c.l.b16 %v256
    %v943 = vunpack.c.h.b16 %v256
    %v944 = vunpack.c.l.b16 %v257
    %v945 = vunpack.c.h.b16 %v257
    %v946 = vunpack.c.l.b16 %v258
    %v947 = vunpack.c.h.b16 %v258
    %v948 = vunpack.c.l.b16 %v259
    %v949 = vunpack.c.h.b16 %v259
    %v950 = vunpack.c.l.b16 %v260
    %v951 = vunpack.c.h.b16 %v260
    %v952 = vunpack.c.l.b16 %v261
    %v953 = vunpack.c.h.b16 %v261
    %v954 = vunpack.c.l.b16 %v262
    %v955 = vunpack.c.h.b16 %v262
    %v956 = vunpack.c.l.b16 %v263
    %v957 = vunpack.c.h.b16 %v263
    %v958 = vunpack.c.l.b16 %v264
    %v959 = vunpack.c.h.b16 %v264
    %v960 = vunpack.c.l.b16 %v265
    %v961 = vunpack.c.h.b16 %v265
    %v962 = vunpack.c.l.b16 %v266
    %v963 = vunpack.c.h.b16 %v266
    %v964 = vunpack.c.l.b16 %v267
    %v965 = vunpack.c.h.b16 %v267
    %v966 = vunpack.c.l.b16 %v268
    %v967 = vunpack.c.h.b16 %v268
    %v968 = vunpack.c.l.b16 %v269
    %v969 = vunpack.c.h.b16 %v269
    %v970 = vunpack.c.l.b16 %v270
    %v971 = vunpack.c.h.b16 %v270
    %v972 = vunpack.c.l.b16 %v271
    %v973 = vunpack.c.h.b16 %v271
    %v974 = vunpack.c.l.b16 %v272
    %v975 = vunpack.c.h.b16 %v272
    %v976 = vunpack.c.l.b16 %v273
    %v977 = vunpack.c.h.b16 %v273
    %v978 = vunpack.c.l.b16 %v274
    %v979 = vunpack.c.h.b16 %v274
    %v980 = vunpack.c.l.b16 %v275
    %v981 = vunpack.c.h.b16 %v275
    %v982 = vunpack.c.l.b16 %v276
    %v983 = vunpack.c.h.b16 %v276
    %v984 = vunpack.c.l.b16 %v277
    %v985 = vunpack.c.h.b16 %v277
    %v986 = vunpack.c.l.b16 %v278
    %v987 = vunpack.c.h.b16 %v278
    %v988 = vunpack.c.l.b16 %v279
    %v989 = vunpack.c.h.b16 %v279
    %v990 = vunpack.c.l.b16 %v280
    %v991 = vunpack.c.h.b16 %v280
    %v992 = vunpack.c.l.b16 %v281
    %v993 = vunpack.c.h.b16 %v281
    %v994 = vunpack.c.l.b16 %v282
    %v995 = vunpack.c.h.b16 %v282
    %v996 = vunpack.c.l.b16 %v283
    %v997 = vunpack.c.h.b16 %v283
    %v998 = vunpack.c.l.b16 %v284
    %v999 = vunpack.c.h.b16 %v284
    %v1000 = vunpack.c.l.b16 %v285
    %v1001 = vunpack.c.h.b16 %v285
    %v1002 = vunpack.c.l.b16 %v286
    %v1003 = vunpack.c.h.b16 %v286
    %v1004 = vunpack.c.l.b16 %v287
    %v1005 = vunpack.c.h.b16 %v287
    %v1006 = vunpack.c.l.b16 %v288
    %v1007 = vunpack.c.h.b16 %v288
    %v1008 = vpack.c.b16 %v564, %v560
    %v1009 = vpack.c.b16 %v565, %v561
    %v1010 = vpack.c.b16 %v566, %v562
    %v1011 = vpack.c.b16 %v567, %v563
    %v1012 = vpack.c.b16 %v572, %v568
    %v1013 = vpack.c.b16 %v573, %v569
    %v1014 = vpack.c.b16 %v574, %v570
    %v1015 = vpack.c.b16 %v575, %v571
    %v1016 = vpack.c.b16 %v580, %v576
    %v1017 = vpack.c.b16 %v581, %v577
    %v1018 = vpack.c.b16 %v582, %v578
    %v1019 = vpack.c.b16 %v583, %v579
    %v1020 = vpack.c.b16 %v588, %v584
    %v1021 = vpack.c.b16 %v589, %v585
    %v1022 = vpack.c.b16 %v590, %v586
    %v1023 = vpack.c.b16 %v591, %v587
    %v1024 = vpack.c.b16 %v596, %v592
    %v1025 = vpack.c.b16 %v597, %v593
    %v1026 = vpack.c.b16 %v598, %v594
    %v1027 = vpack.c.b16 %v599, %v595
    %v1028 = vpack.c.b16 %v604, %v600
    %v1029 = vpack.c.b16 %v605, %v601
    %v1030 = vpack.c.b16 %v606, %v602
    %v1031 = vpack.c.b16 %v607, %v603
    %v1032 = vpack.c.b16 %v612, %v608
    %v1033 = vpack.c.b16 %v613, %v609
    %v1034 = vpack.c.b16 %v614, %v610
    %v1035 = vpack.c.b16 %v615, %v611
    %v1036 = vpack.c.b16 %v620, %v616
    %v1037 = vpack.c.b16 %v621, %v617
    %v1038 = vpack.c.b16 %v622, %v618
    %v1039 = vpack.c.b16 %v623, %v619
    %v1040 = vpack.c.b16 %v628, %v624
    %v1041 = vpack.c.b16 %v629, %v625
    %v1042 = vpack.c.b16 %v630, %v626
    %v1043 = vpack.c.b16 %v631, %v627
    %v1044 = vpack.c.b16 %v636, %v632
    %v1045 = vpack.c.b16 %v637, %v633
    %v1046 = vpack.c.b16 %v638, %v634
    %v1047 = vpack.c.b16 %v639, %v635
    %v1048 = vpack.c.b16 %v644, %v640
    %v1049 = vpack.c.b16 %v645, %v641
    %v1050 = vpack.c.b16 %v646, %v642
    %v1051 = vpack.c.b16 %v647, %v643
    %v1052 = vpack.c.b16 %v652, %v648
    %v1053 = vpack.c.b16 %v653, %v649
    %v1054 = vpack.c.b16 %v654, %v650
    %v1055 = vpack.c.b16 %v655, %v651
    %v1056 = vpack.c.b16 %v660, %v656
    %v1057 = vpack.c.b16 %v661, %v657
    %v1058 = vpack.c.b16 %v662, %v658
    %v1059 = vpack.c.b16 %v663, %v659
    %v1060 = vpack.c.b16 %v668, %v664
    %v1061 = vpack.c.b16 %v669, %v665
    %v1062 = vpack.c.b16 %v670, %v666
    %v1063 = vpack.c.b16 %v671, %v667
    %v1064 = vpack.c.b16 %v676, %v672
    %v1065 = vpack.c.b16 %v677, %v673
    %v1066 = vpack.c.b16 %v678, %v674
    %v1067 = vpack.c.b16 %v679, %v675
    %v1068 = vpack.c.b16 %v684, %v680
    %v1069 = vpack.c.b16 %v685, %v681
    %v1070 = vpack.c.b16 %v686, %v682
    %v1071 = vpack.c.b16 %v687, %v683
    %v1072 = vpack.c.b16 %v692, %v688
    %v1073 = vpack.c.b16 %v693, %v689
    %v1074 = vpack.c.b16 %v694, %v690
    %v1075 = vpack.c.b16 %v695, %v691
    %v1076 = vpack.c.b16 %v700, %v696
    %v1077 = vpack.c.b16 %v701, %v697
    %v1078 = vpack.c.b16 %v702, %v698
    %v1079 = vpack.c.b16 %v703, %v699
    %v1080 = vpack.c.b16 %v708, %v704
    %v1081 = vpack.c.b16 %v709, %v705
    %v1082 = vpack.c.b16 %v710, %v706
    %v1083 = vpack.c.b16 %v711, %v707
    %v1084 = vpack.c.b16 %v716, %v712
    %v1085 = vpack.c.b16 %v717, %v713
    %v1086 = vpack.c.b16 %v718, %v714
    %v1087 = vpack.c.b16 %v719, %v715
    %v1088 = vpack.c.b16 %v724, %v720
    %v1089 = vpack.c.b16 %v725, %v721
    %v1090 = vpack.c.b16 %v726, %v722
    %v1091 = vpack.c.b16 %v727, %v723
    %v1092 = vpack.c.b16 %v732, %v728
    %v1093 = vpack.c.b16 %v733, %v729
    %v1094 = vpack.c.b16 %v734, %v730
    %v1095 = vpack.c.b16 %v735, %v731
    %v1096 = vpack.c.b16 %v740, %v736
    %v1097 = vpack.c.b16 %v741, %v737
    %v1098 = vpack.c.b16 %v742, %v738
    %v1099 = vpack.c.b16 %v743, %v739
    %v1100 = vpack.c.b16 %v748, %v744
    %v1101 = vpack.c.b16 %v749, %v745
    %v1102 = vpack.c.b16 %v750, %v746
    %v1103 = vpack.c.b16 %v751, %v747
    %v1104 = vpack.c.b16 %v756, %v752
    %v1105 = vpack.c.b16 %v757, %v753
    %v1106 = vpack.c.b16 %v758, %v754
    %v1107 = vpack.c.b16 %v759, %v755
    %v1108 = vpack.c.b16 %v764, %v760
    %v1109 = vpack.c.b16 %v765, %v761
    %v1110 = vpack.c.b16 %v766, %v762
    %v1111 = vpack.c.b16 %v767, %v763
    %v1112 = vpack.c.b16 %v772, %v768
    %v1113 = vpack.c.b16 %v773, %v769
    %v1114 = vpack.c.b16 %v774, %v770
    %v1115 = vpack.c.b16 %v775, %v771
    %v1116 = vpack.c.b16 %v780, %v776
    %v1117 = vpack.c.b16 %v781, %v777
    %v1118 = vpack.c.b16 %v782, %v778
    %v1119 = vpack.c.b16 %v783, %v779
    %v1120 = vpack.c.b16 %v788, %v784
    %v1121 = vpack.c.b16 %v789, %v785
    %v1122 = vpack.c.b16 %v790, %v786
    %v1123 = vpack.c.b16 %v791, %v787
    %v1124 = vpack.c.b16 %v796, %v792
    %v1125 = vpack.c.b16 %v797, %v793
    %v1126 = vpack.c.b16 %v798, %v794
    %v1127 = vpack.c.b16 %v799, %v795
    %v1128 = vpack.c.b16 %v804, %v800
    %v1129 = vpack.c.b16 %v805, %v801
    %v1130 = vpack.c.b16 %v806, %v802
    %v1131 = vpack.c.b16 %v807, %v803
    %v1132 = vpack.c.b16 %v812, %v808
    %v1133 = vpack.c.b16 %v813, %v809
    %v1134 = vpack.c.b16 %v814, %v810
    %v1135 = vpack.c.b16 %v815, %v811
    %v1136 = vpack.c.b16 %v820, %v816
    %v1137 = vpack.c.b16 %v821, %v817
    %v1138 = vpack.c.b16 %v822, %v818
    %v1139 = vpack.c.b16 %v823, %v819
    %v1140 = vpack.c.b16 %v828, %v824
    %v1141 = vpack.c.b16 %v829, %v825
    %v1142 = vpack.c.b16 %v830, %v826
    %v1143 = vpack.c.b16 %v831, %v827
    %v1144 = vpack.c.b16 %v836, %v832
    %v1145 = vpack.c.b16 %v837, %v833
    %v1146 = vpack.c.b16 %v838, %v834
    %v1147 = vpack.c.b16 %v839, %v835
    %v1148 = vpack.c.b16 %v844, %v840
    %v1149 = vpack.c.b16 %v845, %v841
    %v1150 = vpack.c.b16 %v846, %v842
    %v1151 = vpack.c.b16 %v847, %v843
    %v1152 = vpack.c.b16 %v852, %v848
    %v1153 = vpack.c.b16 %v853, %v849
    %v1154 = vpack.c.b16 %v854, %v850
    %v1155 = vpack.c.b16 %v855, %v851
    %v1156 = vpack.c.b16 %v860, %v856
    %v1157 = vpack.c.b16 %v861, %v857
    %v1158 = vpack.c.b16 %v862, %v858
    %v1159 = vpack.c.b16 %v863, %v859
    %v1160 = vpack.c.b16 %v868, %v864
    %v1161 = vpack.c.b16 %v869, %v865
    %v1162 = vpack.c.b16 %v870, %v866
    %v1163 = vpack.c.b16 %v871, %v867
    %v1164 = vpack.c.b16 %v876, %v872
    %v1165 = vpack.c.b16 %v877, %v873
    %v1166 = vpack.c.b16 %v878, %v874
    %v1167 = vpack.c.b16 %v879, %v875
    %v1168 = vpack.c.b16 %v884, %v880
    %v1169 = vpack.c.b16 %v885, %v881
    %v1170 = vpack.c.b16 %v886, %v882
    %v1171 = vpack.c.b16 %v887, %v883
    %v1172 = vpack.c.b16 %v892, %v888
    %v1173 = vpack.c.b16 %v893, %v889
    %v1174 = vpack.c.b16 %v894, %v890
    %v1175 = vpack.c.b16 %v895, %v891
    %v1176 = vpack.c.b16 %v900, %v896
    %v1177 = vpack.c.b16 %v901, %v897
    %v1178 = vpack.c.b16 %v902, %v898
    %v1179 = vpack.c.b16 %v903, %v899
    %v1180 = vpack.c.b16 %v908, %v904
    %v1181 = vpack.c.b16 %v909, %v905
    %v1182 = vpack.c.b16 %v910, %v906
    %v1183 = vpack.c.b16 %v911, %v907
    %v1184 = vpack.c.b16 %v916, %v912
    %v1185 = vpack.c.b16 %v917, %v913
    %v1186 = vpack.c.b16 %v918, %v914
    %v1187 = vpack.c.b16 %v919, %v915
    %v1188 = vpack.c.b16 %v924, %v920
    %v1189 = vpack.c.b16 %v925, %v921
    %v1190 = vpack.c.b16 %v926, %v922
    %v1191 = vpack.c.b16 %v927, %v923
    %v1192 = vpack.c.b16 %v932, %v928
    %v1193 = vpack.c.b16 %v933, %v929
    %v1194 = vpack.c.b16 %v934, %v930
    %v1195 = vpack.c.b16 %v935, %v931
    %v1196 = vpack.c.b16 %v940, %v936
    %v1197 = vpack.c.b16 %v941, %v937
    %v1198 = vpack.c.b16 %v942, %v938
    %v1199 = vpack.c.b16 %v943, %v939
    %v1200 = vpack.c.b16 %v948, %v944
    %v1201 = vpack.c.b16 %v949, %v945
    %v1202 = vpack.c.b16 %v950, %v946
    %v1203 = vpack.c.b16 %v951, %v947
    %v1204 = vpack.c.b16 %v956, %v952
    %v1205 = vpack.c.b16 %v957, %v953
    %v1206 = vpack.c.b16 %v958, %v954
    %v1207 = vpack.c.b16 %v959, %v955
    %v1208 = vpack.c.b16 %v964, %v960
    %v1209 = vpack.c.b16 %v965, %v961
    %v1210 = vpack.c.b16 %v966, %v962
    %v1211 = vpack.c.b16 %v967, %v963
    %v1212 = vpack.c.b16 %v972, %v968
    %v1213 = vpack.c.b16 %v973, %v969
    %v1214 = vpack.c.b16 %v974, %v970
    %v1215 = vpack.c.b16 %v975, %v971
    %v1216 = vpack.c.b16 %v980, %v976
    %v1217 = vpack.c.b16 %v981, %v977
    %v1218 = vpack.c.b16 %v982, %v978
    %v1219 = vpack.c.b16 %v983, %v979
    %v1220 = vpack.c.b16 %v988, %v984
    %v1221 = vpack.c.b16 %v989, %v985
    %v1222 = vpack.c.b16 %v990, %v986
    %v1223 = vpack.c.b16 %v991, %v987
    %v1224 = vpack.c.b16 %v996, %v992
    %v1225 = vpack.c.b16 %v997, %v993
    %v1226 = vpack.c.b16 %v998, %v994
    %v1227 = vpack.c.b16 %v999, %v995
    %v1228 = vpack.c.b16 %v1004, %v1000
    %v1229 = vpack.c.b16 %v1005, %v1001
    %v1230 = vpack.c.b16 %v1006, %v1002
    %v1231 = vpack.c.b16 %v1007, %v1003
    %1456 = vmatprep.subr.bf16.mxu0 %v1009
    %1457 = vmatpush1.bf16.msra.mxu0 %v1008
    %1458 = vmatprep.subr.bf16.mxu0 %v1013
    %1459 = vmatpush1.bf16.msra.mxu0 %v1012
    %1460 = vmatprep.subr.bf16.mxu0 %v1017
    %1461 = vmatpush1.bf16.msra.mxu0 %v1016
    %1462 = vmatprep.subr.bf16.mxu0 %v1021
    %1463 = vmatpush1.bf16.msra.mxu0 %v1020
    %1464 = vmatprep.subr.bf16.mxu0 %v1025
    %1465 = vmatpush1.bf16.msra.mxu0 %v1024
    %1466 = vmatprep.subr.bf16.mxu0 %v1029
    %1467 = vmatpush1.bf16.msra.mxu0 %v1028
    %1468 = vmatprep.subr.bf16.mxu0 %v1033
    %1469 = vmatpush1.bf16.msra.mxu0 %v1032
    %1470 = vmatprep.subr.bf16.mxu0 %v1037
    %1471 = vmatpush1.bf16.msra.mxu0 %v1036
    %1472 = vmatprep.subr.bf16.mxu0 %v1041
    %1473 = vmatpush1.bf16.msra.mxu0 %v1040
    %1474 = vmatprep.subr.bf16.mxu0 %v1045
    %1475 = vmatpush1.bf16.msra.mxu0 %v1044
    %1476 = vmatprep.subr.bf16.mxu0 %v1049
    %1477 = vmatpush1.bf16.msra.mxu0 %v1048
    %1478 = vmatprep.subr.bf16.mxu0 %v1053
    %1479 = vmatpush1.bf16.msra.mxu0 %v1052
    %1480 = vmatprep.subr.bf16.mxu0 %v1057
    %1481 = vmatpush1.bf16.msra.mxu0 %v1056
    %1482 = vmatprep.subr.bf16.mxu0 %v1061
    %1483 = vmatpush1.bf16.msra.mxu0 %v1060
    %1484 = vmatprep.subr.bf16.mxu0 %v1065
    %1485 = vmatpush1.bf16.msra.mxu0 %v1064
    %1486 = vmatprep.subr.bf16.mxu0 %v1069
    %1487 = vmatpush1.bf16.msra.mxu0 %v1068
    %1488 = vmatprep.mubr.bf16.mxu0 %v323
    %1489 = vmatmul.mubr.bf16.gmra.mrb[0].mxu0 %v322
    %v1490 = vpop.f32.mrb[0].mxu0
    %v1491 = vadd.f32 %v294, %v1490
    %v1492 = vpop.f32.mrb[0].mxu0
    %v1493 = vadd.f32 %v298, %v1492
    %v1494 = vpop.f32.mrb[0].mxu0
    %v1495 = vpop.f32.mrb[0].mxu0
    %1496 = vdwg.mxu0
    %1497 = vmatprep.subr.bf16.mxu0 %v1073
    %1498 = vmatpush1.bf16.msra.mxu0 %v1072
    %1499 = vmatprep.subr.bf16.mxu0 %v1077
    %1500 = vmatpush1.bf16.msra.mxu0 %v1076
    %1501 = vmatprep.subr.bf16.mxu0 %v1081
    %1502 = vmatpush1.bf16.msra.mxu0 %v1080
    %1503 = vmatprep.subr.bf16.mxu0 %v1085
    %1504 = vmatpush1.bf16.msra.mxu0 %v1084
    %1505 = vmatprep.subr.bf16.mxu0 %v1089
    %1506 = vmatpush1.bf16.msra.mxu0 %v1088
    %1507 = vmatprep.subr.bf16.mxu0 %v1093
    %1508 = vmatpush1.bf16.msra.mxu0 %v1092
    %1509 = vmatprep.subr.bf16.mxu0 %v1097
    %1510 = vmatpush1.bf16.msra.mxu0 %v1096
    %1511 = vmatprep.subr.bf16.mxu0 %v1101
    %1512 = vmatpush1.bf16.msra.mxu0 %v1100
    %1513 = vmatprep.subr.bf16.mxu0 %v1105
    %1514 = vmatpush1.bf16.msra.mxu0 %v1104
    %1515 = vmatprep.subr.bf16.mxu0 %v1109
    %1516 = vmatpush1.bf16.msra.mxu0 %v1108
    %1517 = vmatprep.subr.bf16.mxu0 %v1113
    %1518 = vmatpush1.bf16.msra.mxu0 %v1112
    %1519 = vmatprep.subr.bf16.mxu0 %v1117
    %1520 = vmatpush1.bf16.msra.mxu0 %v1116
    %1521 = vmatprep.subr.bf16.mxu0 %v1121
    %1522 = vmatpush1.bf16.msra.mxu0 %v1120
    %1523 = vmatprep.subr.bf16.mxu0 %v1125
    %1524 = vmatpush1.bf16.msra.mxu0 %v1124
    %1525 = vmatprep.subr.bf16.mxu0 %v1129
    %1526 = vmatpush1.bf16.msra.mxu0 %v1128
    %1527 = vmatprep.subr.bf16.mxu0 %v1133
    %1528 = vmatpush1.bf16.msra.mxu0 %v1132
    %1529 = vmatprep.mubr.bf16.mxu0 %v325
    %1530 = vmatmul.mubr.bf16.gmra.mrb[0].mxu0 %v324
    %v1531 = vpop.f32.mrb[0].mxu0
    %v1532 = vadd.f32 %v1491, %v1531
    %v1533 = vpop.f32.mrb[0].mxu0
    %v1534 = vadd.f32 %v1493, %v1533
    %v1535 = vpop.f32.mrb[0].mxu0
    %v1536 = vpop.f32.mrb[0].mxu0
    %1537 = vdwg.mxu0
    %1538 = vmatprep.subr.bf16.mxu0 %v1137
    %1539 = vmatpush1.bf16.msra.mxu0 %v1136
    %1540 = vmatprep.subr.bf16.mxu0 %v1141
    %1541 = vmatpush1.bf16.msra.mxu0 %v1140
    %1542 = vmatprep.subr.bf16.mxu0 %v1145
    %1543 = vmatpush1.bf16.msra.mxu0 %v1144
    %1544 = vmatprep.subr.bf16.mxu0 %v1149
    %1545 = vmatpush1.bf16.msra.mxu0 %v1148
    %1546 = vmatprep.subr.bf16.mxu0 %v1153
    %1547 = vmatpush1.bf16.msra.mxu0 %v1152
    %1548 = vmatprep.subr.bf16.mxu0 %v1157
    %1549 = vmatpush1.bf16.msra.mxu0 %v1156
    %1550 = vmatprep.subr.bf16.mxu0 %v1161
    %1551 = vmatpush1.bf16.msra.mxu0 %v1160
    %1552 = vmatprep.subr.bf16.mxu0 %v1165
    %1553 = vmatpush1.bf16.msra.mxu0 %v1164
    %1554 = vmatprep.subr.bf16.mxu0 %v1169
    %1555 = vmatpush1.bf16.msra.mxu0 %v1168
    %1556 = vmatprep.subr.bf16.mxu0 %v1173
    %1557 = vmatpush1.bf16.msra.mxu0 %v1172
    %1558 = vmatprep.subr.bf16.mxu0 %v1177
    %1559 = vmatpush1.bf16.msra.mxu0 %v1176
    %1560 = vmatprep.subr.bf16.mxu0 %v1181
    %1561 = vmatpush1.bf16.msra.mxu0 %v1180
    %1562 = vmatprep.subr.bf16.mxu0 %v1185
    %1563 = vmatpush1.bf16.msra.mxu0 %v1184
    %1564 = vmatprep.subr.bf16.mxu0 %v1189
    %1565 = vmatpush1.bf16.msra.mxu0 %v1188
    %1566 = vmatprep.subr.bf16.mxu0 %v1193
    %1567 = vmatpush1.bf16.msra.mxu0 %v1192
    %1568 = vmatprep.subr.bf16.mxu0 %v1197
    %1569 = vmatpush1.bf16.msra.mxu0 %v1196
    %1570 = vmatprep.mubr.bf16.mxu0 %v327
    %1571 = vmatmul.mubr.bf16.gmra.mrb[0].mxu0 %v326
    %v1572 = vpop.f32.mrb[0].mxu0
    %v1573 = vadd.f32 %v1532, %v1572
    %v1574 = vpop.f32.mrb[0].mxu0
    %v1575 = vadd.f32 %v1534, %v1574
    %v1576 = vpop.f32.mrb[0].mxu0
    %v1577 = vpop.f32.mrb[0].mxu0
    %1578 = vdwg.mxu0
    %1579 = vmatprep.subr.bf16.mxu0 %v1201
    %1580 = vmatpush1.bf16.msra.mxu0 %v1200
    %1581 = vmatprep.subr.bf16.mxu0 %v1205
    %1582 = vmatpush1.bf16.msra.mxu0 %v1204
    %1583 = vmatprep.subr.bf16.mxu0 %v1209
    %1584 = vmatpush1.bf16.msra.mxu0 %v1208
    %1585 = vmatprep.subr.bf16.mxu0 %v1213
    %1586 = vmatpush1.bf16.msra.mxu0 %v1212
    %1587 = vmatprep.subr.bf16.mxu0 %v1217
    %1588 = vmatpush1.bf16.msra.mxu0 %v1216
    %1589 = vmatprep.subr.bf16.mxu0 %v1221
    %1590 = vmatpush1.bf16.msra.mxu0 %v1220
    %1591 = vmatprep.subr.bf16.mxu0 %v1225
    %1592 = vmatpush1.bf16.msra.mxu0 %v1224
    %1593 = vmatprep.subr.bf16.mxu0 %v1229
    %1594 = vmatpush1.bf16.msra.mxu0 %v1228
    %1595 = vmatprep.subr.bf16.mxu0 0
    %1596 = vmatpush1.bf16.msra.mxu0 0
    %1597 = vmatprep.subr.bf16.mxu0 0
    %1598 = vmatpush1.bf16.msra.mxu0 0
    %1599 = vmatprep.subr.bf16.mxu0 0
    %1600 = vmatpush1.bf16.msra.mxu0 0
    %1601 = vmatprep.subr.bf16.mxu0 0
    %1602 = vmatpush1.bf16.msra.mxu0 0
    %1603 = vmatprep.subr.bf16.mxu0 0
    %1604 = vmatpush1.bf16.msra.mxu0 0
    %1605 = vmatprep.subr.bf16.mxu0 0
    %1606 = vmatpush1.bf16.msra.mxu0 0
    %1607 = vmatprep.subr.bf16.mxu0 0
    %1608 = vmatpush1.bf16.msra.mxu0 0
    %1609 = vmatprep.subr.bf16.mxu0 0
    %1610 = vmatpush1.bf16.msra.mxu0 0
    %1611 = vmatprep.mubr.bf16.mxu0 0
    %1612 = vmatmul.mubr.bf16.gmra.mrb[0].mxu0 %v328
    %v1613 = vpop.f32.mrb[0].mxu0
    %v1614 = vadd.f32 %v1573, %v1613
    %v1615 = vpop.f32.mrb[0].mxu0
    %v1616 = vadd.f32 %v1575, %v1615
    %v1617 = vpop.f32.mrb[0].mxu0
    %v1618 = vpop.f32.mrb[0].mxu0
    %1619 = vdwg.mxu0
    %1620 = vmatprep.subr.bf16.mxu0 %v1011
    %1621 = vmatpush1.bf16.msra.mxu0 %v1010
    %1622 = vmatprep.subr.bf16.mxu0 %v1015
    %1623 = vmatpush1.bf16.msra.mxu0 %v1014
    %1624 = vmatprep.subr.bf16.mxu0 %v1019
    %1625 = vmatpush1.bf16.msra.mxu0 %v1018
    %1626 = vmatprep.subr.bf16.mxu0 %v1023
    %1627 = vmatpush1.bf16.msra.mxu0 %v1022
    %1628 = vmatprep.subr.bf16.mxu0 %v1027
    %1629 = vmatpush1.bf16.msra.mxu0 %v1026
    %1630 = vmatprep.subr.bf16.mxu0 %v1031
    %1631 = vmatpush1.bf16.msra.mxu0 %v1030
    %1632 = vmatprep.subr.bf16.mxu0 %v1035
    %1633 = vmatpush1.bf16.msra.mxu0 %v1034
    %1634 = vmatprep.subr.bf16.mxu0 %v1039
    %1635 = vmatpush1.bf16.msra.mxu0 %v1038
    %1636 = vmatprep.subr.bf16.mxu0 %v1043
    %1637 = vmatpush1.bf16.msra.mxu0 %v1042
    %1638 = vmatprep.subr.bf16.mxu0 %v1047
    %1639 = vmatpush1.bf16.msra.mxu0 %v1046
    %1640 = vmatprep.subr.bf16.mxu0 %v1051
    %1641 = vmatpush1.bf16.msra.mxu0 %v1050
    %1642 = vmatprep.subr.bf16.mxu0 %v1055
    %1643 = vmatpush1.bf16.msra.mxu0 %v1054
    %1644 = vmatprep.subr.bf16.mxu0 %v1059
    %1645 = vmatpush1.bf16.msra.mxu0 %v1058
    %1646 = vmatprep.subr.bf16.mxu0 %v1063
    %1647 = vmatpush1.bf16.msra.mxu0 %v1062
    %1648 = vmatprep.subr.bf16.mxu0 %v1067
    %1649 = vmatpush1.bf16.msra.mxu0 %v1066
    %1650 = vmatprep.subr.bf16.mxu0 %v1071
    %1651 = vmatpush1.bf16.msra.mxu0 %v1070
    %1652 = vmatprep.mubr.bf16.mxu0 %v323
    %1653 = vmatmul.mubr.bf16.gmra.mrb[0].mxu0 %v322
    %v1654 = vpop.f32.mrb[0].mxu0
    %v1655 = vadd.f32 %v302, %v1654
    %v1656 = vpop.f32.mrb[0].mxu0
    %v1657 = vadd.f32 %v306, %v1656
    %v1658 = vpop.f32.mrb[0].mxu0
    %v1659 = vpop.f32.mrb[0].mxu0
    %1660 = vdwg.mxu0
    %1661 = vmatprep.subr.bf16.mxu0 %v1075
    %1662 = vmatpush1.bf16.msra.mxu0 %v1074
    %1663 = vmatprep.subr.bf16.mxu0 %v1079
    %1664 = vmatpush1.bf16.msra.mxu0 %v1078
    %1665 = vmatprep.subr.bf16.mxu0 %v1083
    %1666 = vmatpush1.bf16.msra.mxu0 %v1082
    %1667 = vmatprep.subr.bf16.mxu0 %v1087
    %1668 = vmatpush1.bf16.msra.mxu0 %v1086
    %1669 = vmatprep.subr.bf16.mxu0 %v1091
    %1670 = vmatpush1.bf16.msra.mxu0 %v1090
    %1671 = vmatprep.subr.bf16.mxu0 %v1095
    %1672 = vmatpush1.bf16.msra.mxu0 %v1094
    %1673 = vmatprep.subr.bf16.mxu0 %v1099
    %1674 = vmatpush1.bf16.msra.mxu0 %v1098
    %1675 = vmatprep.subr.bf16.mxu0 %v1103
    %1676 = vmatpush1.bf16.msra.mxu0 %v1102
    %1677 = vmatprep.subr.bf16.mxu0 %v1107
    %1678 = vmatpush1.bf16.msra.mxu0 %v1106
    %1679 = vmatprep.subr.bf16.mxu0 %v1111
    %1680 = vmatpush1.bf16.msra.mxu0 %v1110
    %1681 = vmatprep.subr.bf16.mxu0 %v1115
    %1682 = vmatpush1.bf16.msra.mxu0 %v1114
    %1683 = vmatprep.subr.bf16.mxu0 %v1119
    %1684 = vmatpush1.bf16.msra.mxu0 %v1118
    %1685 = vmatprep.subr.bf16.mxu0 %v1123
    %1686 = vmatpush1.bf16.msra.mxu0 %v1122
    %1687 = vmatprep.subr.bf16.mxu0 %v1127
    %1688 = vmatpush1.bf16.msra.mxu0 %v1126
    %1689 = vmatprep.subr.bf16.mxu0 %v1131
    %1690 = vmatpush1.bf16.msra.mxu0 %v1130
    %1691 = vmatprep.subr.bf16.mxu0 %v1135
    %1692 = vmatpush1.bf16.msra.mxu0 %v1134
    %1693 = vmatprep.mubr.bf16.mxu0 %v325
    %1694 = vmatmul.mubr.bf16.gmra.mrb[0].mxu0 %v324
    %v1695 = vpop.f32.mrb[0].mxu0
    %v1696 = vadd.f32 %v1655, %v1695
    %v1697 = vpop.f32.mrb[0].mxu0
    %v1698 = vadd.f32 %v1657, %v1697
    %v1699 = vpop.f32.mrb[0].mxu0
    %v1700 = vpop.f32.mrb[0].mxu0
    %1701 = vdwg.mxu0
    %1702 = vmatprep.subr.bf16.mxu0 %v1139
    %1703 = vmatpush1.bf16.msra.mxu0 %v1138
    %1704 = vmatprep.subr.bf16.mxu0 %v1143
    %1705 = vmatpush1.bf16.msra.mxu0 %v1142
    %1706 = vmatprep.subr.bf16.mxu0 %v1147
    %1707 = vmatpush1.bf16.msra.mxu0 %v1146
    %1708 = vmatprep.subr.bf16.mxu0 %v1151
    %1709 = vmatpush1.bf16.msra.mxu0 %v1150
    %1710 = vmatprep.subr.bf16.mxu0 %v1155
    %1711 = vmatpush1.bf16.msra.mxu0 %v1154
    %1712 = vmatprep.subr.bf16.mxu0 %v1159
    %1713 = vmatpush1.bf16.msra.mxu0 %v1158
    %1714 = vmatprep.subr.bf16.mxu0 %v1163
    %1715 = vmatpush1.bf16.msra.mxu0 %v1162
    %1716 = vmatprep.subr.bf16.mxu0 %v1167
    %1717 = vmatpush1.bf16.msra.mxu0 %v1166
    %1718 = vmatprep.subr.bf16.mxu0 %v1171
    %1719 = vmatpush1.bf16.msra.mxu0 %v1170
    %1720 = vmatprep.subr.bf16.mxu0 %v1175
    %1721 = vmatpush1.bf16.msra.mxu0 %v1174
    %1722 = vmatprep.subr.bf16.mxu0 %v1179
    %1723 = vmatpush1.bf16.msra.mxu0 %v1178
    %1724 = vmatprep.subr.bf16.mxu0 %v1183
    %1725 = vmatpush1.bf16.msra.mxu0 %v1182
    %1726 = vmatprep.subr.bf16.mxu0 %v1187
    %1727 = vmatpush1.bf16.msra.mxu0 %v1186
    %1728 = vmatprep.subr.bf16.mxu0 %v1191
    %1729 = vmatpush1.bf16.msra.mxu0 %v1190
    %1730 = vmatprep.subr.bf16.mxu0 %v1195
    %1731 = vmatpush1.bf16.msra.mxu0 %v1194
    %1732 = vmatprep.subr.bf16.mxu0 %v1199
    %1733 = vmatpush1.bf16.msra.mxu0 %v1198
    %1734 = vmatprep.mubr.bf16.mxu0 %v327
    %1735 = vmatmul.mubr.bf16.gmra.mrb[0].mxu0 %v326
    %v1736 = vpop.f32.mrb[0].mxu0
    %v1737 = vadd.f32 %v1696, %v1736
    %v1738 = vpop.f32.mrb[0].mxu0
    %v1739 = vadd.f32 %v1698, %v1738
    %v1740 = vpop.f32.mrb[0].mxu0
    %v1741 = vpop.f32.mrb[0].mxu0
    %1742 = vdwg.mxu0
    %1743 = vmatprep.subr.bf16.mxu0 %v1203
    %1744 = vmatpush1.bf16.msra.mxu0 %v1202
    %1745 = vmatprep.subr.bf16.mxu0 %v1207
    %1746 = vmatpush1.bf16.msra.mxu0 %v1206
    %1747 = vmatprep.subr.bf16.mxu0 %v1211
    %1748 = vmatpush1.bf16.msra.mxu0 %v1210
    %1749 = vmatprep.subr.bf16.mxu0 %v1215
    %1750 = vmatpush1.bf16.msra.mxu0 %v1214
    %1751 = vmatprep.subr.bf16.mxu0 %v1219
    %1752 = vmatpush1.bf16.msra.mxu0 %v1218
    %1753 = vmatprep.subr.bf16.mxu0 %v1223
    %1754 = vmatpush1.bf16.msra.mxu0 %v1222
    %1755 = vmatprep.subr.bf16.mxu0 %v1227
    %1756 = vmatpush1.bf16.msra.mxu0 %v1226
    %1757 = vmatprep.subr.bf16.mxu0 %v1231
    %1758 = vmatpush1.bf16.msra.mxu0 %v1230
    %1759 = vmatprep.subr.bf16.mxu0 0
    %1760 = vmatpush1.bf16.msra.mxu0 0
    %1761 = vmatprep.subr.bf16.mxu0 0
    %1762 = vmatpush1.bf16.msra.mxu0 0
    %1763 = vmatprep.subr.bf16.mxu0 0
    %1764 = vmatpush1.bf16.msra.mxu0 0
    %1765 = vmatprep.subr.bf16.mxu0 0
    %1766 = vmatpush1.bf16.msra.mxu0 0
    %1767 = vmatprep.subr.bf16.mxu0 0
    %1768 = vmatpush1.bf16.msra.mxu0 0
    %1769 = vmatprep.subr.bf16.mxu0 0
    %1770 = vmatpush1.bf16.msra.mxu0 0
    %1771 = vmatprep.subr.bf16.mxu0 0
    %1772 = vmatpush1.bf16.msra.mxu0 0
    %1773 = vmatprep.subr.bf16.mxu0 0
    %1774 = vmatpush1.bf16.msra.mxu0 0
    %1775 = vmatprep.mubr.bf16.mxu0 0
    %1776 = vmatmul.mubr.bf16.gmra.mrb[0].mxu0 %v328
    %v1777 = vpop.f32.mrb[0].mxu0
    %v1778 = vadd.f32 %v1737, %v1777
    %v1779 = vpop.f32.mrb[0].mxu0
    %v1780 = vadd.f32 %v1739, %v1779
    %v1781 = vpop.f32.mrb[0].mxu0
    %v1782 = vpop.f32.mrb[0].mxu0
    %1783 = vdwg.mxu0
    %v1784 = vmax.f32 %v1614, 0.0
    %v1785 = vmax.f32 %v1616, 0.0
    %v1786 = vmax.f32 %v1778, 0.0
    %v1787 = vmax.f32 %v1780, 0.0
    %v1788 = vld [vmem:[#allocation7] sm:$0xff]
    %v1789 = vld [vmem:[#allocation7 + $0x8] sm:$0xff]
    %v1790 = vld [vmem:[#allocation7 + $0x10] sm:$0xff]
    %v1791 = vld [vmem:[#allocation7 + $0x18] sm:$0xff]
    %v1792 = vld [vmem:[#allocation7 + $0x20] sm:$0xff]
    %v1793 = vld [vmem:[#allocation7 + $0x28] sm:$0xff]
    %v1794 = vld [vmem:[#allocation7 + $0x30] sm:$0xff]
    %v1795 = vld [vmem:[#allocation7 + $0x38] sm:$0xff]
    %v1796 = vld [vmem:[#allocation7 + $0x40] sm:$0xff]
    %v1797 = vld [vmem:[#allocation7 + $0x48] sm:$0xff]
    %v1798 = vld [vmem:[#allocation7 + $0x50] sm:$0xff]
    %v1799 = vld [vmem:[#allocation7 + $0x58] sm:$0xff]
    %v1800 = vld [vmem:[#allocation7 + $0x60] sm:$0xff]
    %v1801 = vld [vmem:[#allocation7 + $0x68] sm:$0xff]
    %v1802 = vld [vmem:[#allocation7 + $0x70] sm:$0xff]
    %v1803 = vld [vmem:[#allocation7 + $0x78] sm:$0xff]
    %v1804 = vld [vmem:[#allocation7 + $0x80] sm:$0xff]
    %v1805 = vld [vmem:[#allocation7 + $0x88] sm:$0xff]
    %v1806 = vld [vmem:[#allocation7 + $0x90] sm:$0xff]
    %v1807 = vld [vmem:[#allocation7 + $0x98] sm:$0xff]
    %v1808 = vld [vmem:[#allocation7 + $0xa0] sm:$0xff]
    %v1809 = vld [vmem:[#allocation7 + $0xa8] sm:$0xff]
    %v1810 = vld [vmem:[#allocation7 + $0xb0] sm:$0xff]
    %v1811 = vld [vmem:[#allocation7 + $0xb8] sm:$0xff]
    %v1812 = vld [vmem:[#allocation7 + $0xc0] sm:$0xff]
    %v1813 = vld [vmem:[#allocation7 + $0xc8] sm:$0xff]
    %v1814 = vld [vmem:[#allocation7 + $0xd0] sm:$0xff]
    %v1815 = vld [vmem:[#allocation7 + $0xd8] sm:$0xff]
    %v1816 = vld [vmem:[#allocation7 + $0xe0] sm:$0xff]
    %v1817 = vld [vmem:[#allocation7 + $0xe8] sm:$0xff]
    %v1818 = vld [vmem:[#allocation7 + $0xf0] sm:$0xff]
    %v1819 = vld [vmem:[#allocation7 + $0xf8] sm:$0xff]
    %v1820 = vld [vmem:[#allocation7 + $0x100] sm:$0xff]
    %v1821 = vld [vmem:[#allocation7 + $0x108] sm:$0xff]
    %v1822 = vld [vmem:[#allocation7 + $0x110] sm:$0xff]
    %v1823 = vld [vmem:[#allocation7 + $0x118] sm:$0xff]
    %v1824 = vld [vmem:[#allocation7 + $0x120] sm:$0xff]
    %v1825 = vld [vmem:[#allocation7 + $0x128] sm:$0xff]
    %v1826 = vld [vmem:[#allocation7 + $0x130] sm:$0xff]
    %v1827 = vld [vmem:[#allocation7 + $0x138] sm:$0xff]
    %v1828 = vld [vmem:[#allocation7 + $0x140] sm:$0xff]
    %v1829 = vld [vmem:[#allocation7 + $0x148] sm:$0xff]
    %v1830 = vld [vmem:[#allocation7 + $0x150] sm:$0xff]
    %v1831 = vld [vmem:[#allocation7 + $0x158] sm:$0xff]
    %v1832 = vld [vmem:[#allocation7 + $0x160] sm:$0xff]
    %v1833 = vld [vmem:[#allocation7 + $0x168] sm:$0xff]
    %v1834 = vld [vmem:[#allocation7 + $0x170] sm:$0xff]
    %v1835 = vld [vmem:[#allocation7 + $0x178] sm:$0xff]
    %v1836 = vld [vmem:[#allocation7 + $0x180] sm:$0xff]
    %v1837 = vld [vmem:[#allocation7 + $0x188] sm:$0xff]
    %v1838 = vld [vmem:[#allocation7 + $0x190] sm:$0xff]
    %v1839 = vld [vmem:[#allocation7 + $0x198] sm:$0xff]
    %v1840 = vld [vmem:[#allocation7 + $0x1a0] sm:$0xff]
    %v1841 = vld [vmem:[#allocation7 + $0x1a8] sm:$0xff]
    %v1842 = vld [vmem:[#allocation7 + $0x1b0] sm:$0xff]
    %v1843 = vld [vmem:[#allocation7 + $0x1b8] sm:$0xff]
    %v1844 = vld [vmem:[#allocation7 + $0x1c0] sm:$0xff]
    %v1845 = vld [vmem:[#allocation7 + $0x1c8] sm:$0xff]
    %v1846 = vld [vmem:[#allocation7 + $0x1d0] sm:$0xff]
    %v1847 = vld [vmem:[#allocation7 + $0x1d8] sm:$0xff]
    %v1848 = vld [vmem:[#allocation7 + $0x1e0] sm:$0xff]
    %v1849 = vld [vmem:[#allocation7 + $0x1e8] sm:$0xff]
    %v1850 = vld [vmem:[#allocation7 + $0x1f0] sm:$0xff]
    %v1851 = vld [vmem:[#allocation7 + $0x1f8] sm:$0xff]
    %v1852 = vld [vmem:[%s4] sm:$0x1]
    %v1854 = vlaneseq
    %v1855 = vshrl.u32 %v1854, 7
    %v1856 = vsub.s32 0, %v1855
    %v1857 = vrot.slane %v1852, %v1856
    %1859 = vmatprep.subr.mxu0 0.0
    %1860 = vmatpush1.msra.mxu0 %v1788
    %1861 = vmatprep.subr.mxu0 0.0
    %1862 = vmatpush1.msra.mxu0 %v1789
    %1863 = vmatprep.subr.mxu0 0.0
    %1864 = vmatpush1.msra.mxu0 %v1790
    %1865 = vmatprep.subr.mxu0 0.0
    %1866 = vmatpush1.msra.mxu0 %v1791
    %1867 = vmatprep.subr.mxu0 0.0
    %1868 = vmatpush1.msra.mxu0 %v1792
    %1869 = vmatprep.subr.mxu0 0.0
    %1870 = vmatpush1.msra.mxu0 %v1793
    %1871 = vmatprep.subr.mxu0 0.0
    %1872 = vmatpush1.msra.mxu0 %v1794
    %1873 = vmatprep.subr.mxu0 0.0
    %1874 = vmatpush1.msra.mxu0 %v1795
    %1875 = vmatprep.subr.mxu0 0.0
    %1876 = vmatpush1.msra.mxu0 %v1796
    %1877 = vmatprep.subr.mxu0 0.0
    %1878 = vmatpush1.msra.mxu0 %v1797
    %1879 = vmatprep.subr.mxu0 0.0
    %1880 = vmatpush1.msra.mxu0 %v1798
    %1881 = vmatprep.subr.mxu0 0.0
    %1882 = vmatpush1.msra.mxu0 %v1799
    %1883 = vmatprep.subr.mxu0 0.0
    %1884 = vmatpush1.msra.mxu0 %v1800
    %1885 = vmatprep.subr.mxu0 0.0
    %1886 = vmatpush1.msra.mxu0 %v1801
    %1887 = vmatprep.subr.mxu0 0.0
    %1888 = vmatpush1.msra.mxu0 %v1802
    %1889 = vmatprep.subr.mxu0 0.0
    %1890 = vmatpush1.msra.mxu0 %v1803
    %1891 = vmatprep.subr.mxu0 0.0
    %1892 = vmatpush1.msra.mxu0 %v1804
    %1893 = vmatprep.subr.mxu0 0.0
    %1894 = vmatpush1.msra.mxu0 %v1805
    %1895 = vmatprep.subr.mxu0 0.0
    %1896 = vmatpush1.msra.mxu0 %v1806
    %1897 = vmatprep.subr.mxu0 0.0
    %1898 = vmatpush1.msra.mxu0 %v1807
    %1899 = vmatprep.subr.mxu0 0.0
    %1900 = vmatpush1.msra.mxu0 %v1808
    %1901 = vmatprep.subr.mxu0 0.0
    %1902 = vmatpush1.msra.mxu0 %v1809
    %1903 = vmatprep.subr.mxu0 0.0
    %1904 = vmatpush1.msra.mxu0 %v1810
    %1905 = vmatprep.subr.mxu0 0.0
    %1906 = vmatpush1.msra.mxu0 %v1811
    %1907 = vmatprep.subr.mxu0 0.0
    %1908 = vmatpush1.msra.mxu0 %v1812
    %1909 = vmatprep.subr.mxu0 0.0
    %1910 = vmatpush1.msra.mxu0 %v1813
    %1911 = vmatprep.subr.mxu0 0.0
    %1912 = vmatpush1.msra.mxu0 %v1814
    %1913 = vmatprep.subr.mxu0 0.0
    %1914 = vmatpush1.msra.mxu0 %v1815
    %1915 = vmatprep.subr.mxu0 0.0
    %1916 = vmatpush1.msra.mxu0 %v1816
    %1917 = vmatprep.subr.mxu0 0.0
    %1918 = vmatpush1.msra.mxu0 %v1817
    %1919 = vmatprep.subr.mxu0 0.0
    %1920 = vmatpush1.msra.mxu0 %v1818
    %1921 = vmatprep.subr.mxu0 0.0
    %1922 = vmatpush1.msra.mxu0 %v1819
    %1923 = vmatprep.mubr.f32.mxu0 %v1785
    %1924 = vmatmul.mubr.f32.gmra.mrb[0].mxu0 %v1784
    %v1925 = vpop.f32.mrb[0].mxu0
    %v1926 = vadd.f32 %v1857, %v1925
    %v1927 = vpop.f32.mrb[0].mxu0
    %1928 = vdwg.mxu0
    %1929 = vmatprep.subr.mxu0 0.0
    %1930 = vmatpush1.msra.mxu0 %v1820
    %1931 = vmatprep.subr.mxu0 0.0
    %1932 = vmatpush1.msra.mxu0 %v1821
    %1933 = vmatprep.subr.mxu0 0.0
    %1934 = vmatpush1.msra.mxu0 %v1822
    %1935 = vmatprep.subr.mxu0 0.0
    %1936 = vmatpush1.msra.mxu0 %v1823
    %1937 = vmatprep.subr.mxu0 0.0
    %1938 = vmatpush1.msra.mxu0 %v1824
    %1939 = vmatprep.subr.mxu0 0.0
    %1940 = vmatpush1.msra.mxu0 %v1825
    %1941 = vmatprep.subr.mxu0 0.0
    %1942 = vmatpush1.msra.mxu0 %v1826
    %1943 = vmatprep.subr.mxu0 0.0
    %1944 = vmatpush1.msra.mxu0 %v1827
    %1945 = vmatprep.subr.mxu0 0.0
    %1946 = vmatpush1.msra.mxu0 %v1828
    %1947 = vmatprep.subr.mxu0 0.0
    %1948 = vmatpush1.msra.mxu0 %v1829
    %1949 = vmatprep.subr.mxu0 0.0
    %1950 = vmatpush1.msra.mxu0 %v1830
    %1951 = vmatprep.subr.mxu0 0.0
    %1952 = vmatpush1.msra.mxu0 %v1831
    %1953 = vmatprep.subr.mxu0 0.0
    %1954 = vmatpush1.msra.mxu0 %v1832
    %1955 = vmatprep.subr.mxu0 0.0
    %1956 = vmatpush1.msra.mxu0 %v1833
    %1957 = vmatprep.subr.mxu0 0.0
    %1958 = vmatpush1.msra.mxu0 %v1834
    %1959 = vmatprep.subr.mxu0 0.0
    %1960 = vmatpush1.msra.mxu0 %v1835
    %1961 = vmatprep.subr.mxu0 0.0
    %1962 = vmatpush1.msra.mxu0 %v1836
    %1963 = vmatprep.subr.mxu0 0.0
    %1964 = vmatpush1.msra.mxu0 %v1837
    %1965 = vmatprep.subr.mxu0 0.0
    %1966 = vmatpush1.msra.mxu0 %v1838
    %1967 = vmatprep.subr.mxu0 0.0
    %1968 = vmatpush1.msra.mxu0 %v1839
    %1969 = vmatprep.subr.mxu0 0.0
    %1970 = vmatpush1.msra.mxu0 %v1840
    %1971 = vmatprep.subr.mxu0 0.0
    %1972 = vmatpush1.msra.mxu0 %v1841
    %1973 = vmatprep.subr.mxu0 0.0
    %1974 = vmatpush1.msra.mxu0 %v1842
    %1975 = vmatprep.subr.mxu0 0.0
    %1976 = vmatpush1.msra.mxu0 %v1843
    %1977 = vmatprep.subr.mxu0 0.0
    %1978 = vmatpush1.msra.mxu0 %v1844
    %1979 = vmatprep.subr.mxu0 0.0
    %1980 = vmatpush1.msra.mxu0 %v1845
    %1981 = vmatprep.subr.mxu0 0.0
    %1982 = vmatpush1.msra.mxu0 %v1846
    %1983 = vmatprep.subr.mxu0 0.0
    %1984 = vmatpush1.msra.mxu0 %v1847
    %1985 = vmatprep.subr.mxu0 0.0
    %1986 = vmatpush1.msra.mxu0 %v1848
    %1987 = vmatprep.subr.mxu0 0.0
    %1988 = vmatpush1.msra.mxu0 %v1849
    %1989 = vmatprep.subr.mxu0 0.0
    %1990 = vmatpush1.msra.mxu0 %v1850
    %1991 = vmatprep.subr.mxu0 0.0
    %1992 = vmatpush1.msra.mxu0 %v1851
    %1993 = vmatprep.mubr.f32.mxu0 %v1787
    %1994 = vmatmul.mubr.f32.gmra.mrb[0].mxu0 %v1786
    %v1995 = vpop.f32.mrb[0].mxu0
    %v1996 = vadd.f32 %v1926, %v1995
    %v1997 = vpop.f32.mrb[0].mxu0
    %1998 = vdwg.mxu0
    %1999 = vst [vmem:[#allocation8] sm:$0xff] %v1996
    // Predicated region
    $region34: #{tpu_custom_call.1} parent=1 // pred_check
      _
    $region35: #{tpu_custom_call.1} parent=1 // pred_check_branch
      %2001 = sbr.rel (0) target = $region37
    $region36: #{tpu_custom_call.1} parent=1 // pred_region
      %s2003 = ssub.s32 128, 128
      %2004 = vsyncadd [#allocation4], %s2003
      %s2006 = sshll.u32 [#allocation8], 4
      %s2007 = int_to_ptr.vmem [resolvable:$true] %s2006
      %2009 = dma.vmem_to_hbm [thread:$0]  %s2007, 128, %s5, [#allocation4]
    $region37: #{tpu_custom_call.1} parent=1 // pred_fallthru
      _
    // Predicated region
    $region38: #{tpu_custom_call.1} parent=1 // pred_check
      _
    $region39: #{tpu_custom_call.1} parent=1 // pred_check_branch
      %2011 = sbr.rel (0) target = $region41
    $region40: #{tpu_custom_call.1} parent=1 // pred_region
      %2012 = dma.done [#allocation4], 128
    $region41: #{tpu_custom_call.1} parent=1 // pred_fallthru
      _
    %2013 = vsyncpa [#allocation3], 1
    %2014 = vsyncpa [#allocation6], 1
    %2015 = vsyncpa [#allocation4], 1

</llo_original>
